<compile_context>
chip_gen: v6e
topology: v6e:2x2x1
jax: 0.10.0
libtpu: 0.0.40
codegen_flags: <defaults>
</compile_context>

<pallas_src>
import functools
import math

import jax
import jax.numpy as jnp
from jax.experimental import pallas as pl
from jax.experimental.pallas import tpu as pltpu


def _round_up(x, m):
    return (x + m - 1) // m * m


def _memory_kernel(mk_ref, mv_ref, qk_ref, mem_ref, *p_refs, scale, n_valid, n_rows):
    """One (batch b, query tile m) grid step.

    mk_ref : (n_rows, Dk_pad)  memory keys (transposed, zero-padded, resident)
    mv_ref : (Dv, n_valid)     memory values (unpadded, resident)
    qk_ref : (Dk_pad, TM)      query-key tile (zero-padded Dk / M)
    mem_ref: (Dv, TM)          read-out tile
    p_refs : optionally ((n_valid, TM),) softmax output tile
    """
    mk = mk_ref[...]
    # Fold 1/sqrt(Dk) into the small (Dk_pad, TM) operand, not the (N, TM) scores.
    qk = qk_ref[...] * jnp.asarray(scale, qk_ref.dtype)

    # s[n, m] = sum_d mk[n, d] * qk[d, m]   (MXU, f32 accumulate)
    s = jnp.dot(mk, qk, preferred_element_type=jnp.float32)           # (n_rows, TM)

    if n_rows != n_valid:
        # Static branch: only emitted when N was padded to a sublane multiple.
        row = jax.lax.broadcasted_iota(jnp.int32, s.shape, 0)
        s = jnp.where(row < n_valid, s, -jnp.inf)                     # -> exact-zero e rows

    # Softmax over the memory axis (axis 0); f32 (v5e has no bf16 VPU/EUP).
    s_max = jnp.max(s, axis=0, keepdims=True)
    e = jnp.exp(s - s_max)
    denom = jnp.sum(e, axis=0, keepdims=True)
    inv = pl.reciprocal(denom, approx=False)                          # (1, TM)

    e_v = e[:n_valid] if n_rows != n_valid else e                     # (n_valid, TM)

    # mem[dv, m] = (sum_n mv[dv, n] * e[n, m]) * inv[m]
    # Feeding raw exponentials to the MXU decouples it from the (N, TM)
    # normalize and shrinks the scaling on this path to Dv*TM VPU ops.
    mv = mv_ref[...]
    mem = jnp.dot(mv, e_v.astype(mv.dtype), preferred_element_type=jnp.float32)
    mem_ref[...] = (mem * inv).astype(mem_ref.dtype)

    if p_refs:
        p_refs[0][...] = (e_v * inv).astype(p_refs[0].dtype)


def memory_forward(m_k, m_v, q_k, *, tm_max=1024, return_p=True):
    """Pallas implementation of Memory.forward. Returns (mem, p); p is None if return_p=False."""
    B, Dk, Hm, Wm = m_k.shape
    _, Dv, _, _ = m_v.shape
    _, _, Hq, Wq = q_k.shape
    N = Hm * Wm
    M = Hq * Wq

    Dk_pad = _round_up(Dk, 128)      # lane-dense mk block / full-width contraction
    N_rows = _round_up(N, 8)         # sublane-aligned score rows (mk only; mv unpadded)
    M128 = _round_up(M, 128)

    # ---- VMEM budget -> query-tile width TM --------------------------------
    try:
        info = pltpu.get_tpu_info()
        vmem_cap = int(getattr(info, "vmem_capacity_bytes", 64 * 1024 * 1024))
    except Exception:
        vmem_cap = 64 * 1024 * 1024  # conservative (v7x per-TensorCore)

    def _vmem_bytes(tm, resident_bufs):
        b = resident_bufs * N_rows * Dk_pad * 4                            # mk (resident)
        b += resident_bufs * _round_up(Dv, 8) * _round_up(N, 128) * 4      # mv (resident)
        b += 2 * Dk_pad * tm * 4                                           # qk (double buffered)
        b += 2 * _round_up(Dv, 8) * tm * 4                                 # mem out
        if return_p:
            b += 2 * N_rows * tm * 4                                       # p out
        b += 3 * N_rows * tm * 4                                           # s / e / softmax temps
        return b

    budget = 0.6 * vmem_cap
    TM = 128
    for cand in (1024, 512, 256, 128):
        if cand <= tm_max and cand <= M128 and _vmem_bytes(cand, 1) <= budget:
            TM = cand
            break
    # Keep >= 2 grid points so the second TensorCore (v7x megacore) has work.
    while TM > 128 and B * (-(-M128 // TM)) < 2:
        TM //= 2
    M_pad = _round_up(M, TM)

    # Generous scoped-VMEM limit (covers the double-buffered fallback path too).
    need = _vmem_bytes(TM, 2)
    vmem_limit = int(min(0.94 * vmem_cap, max(1.5 * need, 32 * 1024 * 1024)))

    # ---- Wrapper-side layout plumbing (XLA) --------------------------------
    # mk: transpose once + zero-pad (N -> N_rows, Dk -> Dk_pad). mv: untouched
    # (full-dim blocks are exempt from the (8,128) rule), so no HBM copy of the
    # big value bank is made.
    mk_t = jnp.transpose(m_k.reshape(B, Dk, N), (0, 2, 1))                 # (B, N, Dk)
    if N_rows != N or Dk_pad != Dk:
        mk_t = jnp.pad(mk_t, ((0, 0), (0, N_rows - N), (0, Dk_pad - Dk)))
    mv = m_v.reshape(B, Dv, N)
    qk = q_k.reshape(B, Dk, M)
    if Dk_pad != Dk or M_pad != M:
        qk = jnp.pad(qk, ((0, 0), (0, Dk_pad - Dk), (0, M_pad - M)))

    kernel = functools.partial(
        _memory_kernel, scale=1.0 / math.sqrt(Dk), n_valid=N, n_rows=N_rows)

    out_shape = [jax.ShapeDtypeStruct((B, Dv, M_pad), m_v.dtype)]
    out_specs = [pl.BlockSpec((None, Dv, TM), lambda b, m: (b, 0, m))]
    if return_p:
        out_shape.append(jax.ShapeDtypeStruct((B, N, M_pad), jnp.float32))
        out_specs.append(pl.BlockSpec((None, N, TM), lambda b, m: (b, 0, m)))
    out_shape = tuple(out_shape)
    out_specs = tuple(out_specs)

    # TODO(synk): for very large N (multi-frame memory banks) add a flash-style
    # online-softmax N grid axis so VMEM stays bounded independent of N.
    def _call(resident_kwargs):
        in_specs = [
            # mk / mv index-maps return the same block across the m axis, so they
            # stay resident within a batch; single-buffer them when supported.
            pl.BlockSpec((None, N_rows, Dk_pad), lambda b, m: (b, 0, 0), **resident_kwargs),
            pl.BlockSpec((None, Dv, N), lambda b, m: (b, 0, 0), **resident_kwargs),
            pl.BlockSpec((None, Dk_pad, TM), lambda b, m: (b, 0, m)),
        ]
        return pl.pallas_call(
            kernel,
            out_shape=out_shape,
            grid_spec=pltpu.PrefetchScalarGridSpec(
                num_scalar_prefetch=0,
                grid=(B, M_pad // TM),
                in_specs=in_specs,
                out_specs=out_specs,
            ),
            compiler_params=pltpu.CompilerParams(
                dimension_semantics=("parallel", "parallel"),
                vmem_limit_bytes=vmem_limit,
            ),
        )(mk_t, mv, qk)

    try:
        outs = _call(dict(pipeline_mode=pl.Buffered(1)))
    except Exception:
        # pipeline_mode / single-buffering not supported on this JAX version:
        # fall back to default double-buffered pipelining.
        outs = _call({})

    mem = outs[0][:, :, :M].reshape(B, Dv, Hq, Wq)
    if not return_p:
        return mem, None
    p = outs[1]
    if M_pad != M:
        p = p[:, :, :M]
    return mem, p


def _reference(m_k, m_v, q_k):
    B, Dk, Hm, Wm = m_k.shape
    _, _, Hq, Wq = q_k.shape
    _, Dv, _, _ = m_v.shape
    mk = jnp.transpose(m_k.reshape(B, Dk, Hm * Wm), (0, 2, 1))
    qk = q_k.reshape(B, Dk, Hq * Wq)
    p = jnp.einsum("bnd,bdm->bnm", mk, qk) / math.sqrt(Dk)
    p = jax.nn.softmax(p, axis=1)
    mv = m_v.reshape(B, Dv, Hm * Wm)
    mem = jnp.einsum("bdn,bnm->bdm", mv, p).reshape(B, Dv, Hq, Wq)
    return mem, p


if __name__ == "__main__":
    key = jax.random.PRNGKey(0)

    # Case 1: aligned N (multiple of 8), M padded 64 -> 128.
    # Case 2: ragged N and M (exercises -inf row masking + M padding/slicing).
    cases = [
        dict(B=2, Dk=8, Dv=16, Hm=8, Wm=8, Hq=8, Wq=8),
        dict(B=2, Dk=8, Dv=16, Hm=7, Wm=7, Hq=6, Wq=6),
    ]
    for cfg in cases:
        key, k1, k2, k3 = jax.random.split(key, 4)
        m_k = jax.random.normal(k1, (cfg["B"], cfg["Dk"], cfg["Hm"], cfg["Wm"]), jnp.float32)
        m_v = jax.random.normal(k2, (cfg["B"], cfg["Dv"], cfg["Hm"], cfg["Wm"]), jnp.float32)
        q_k = jax.random.normal(k3, (cfg["B"], cfg["Dk"], cfg["Hq"], cfg["Wq"]), jnp.float32)

        mem, p = memory_forward(m_k, m_v, q_k)
        jax.block_until_ready((mem, p))

        mem_ref, p_ref = _reference(m_k, m_v, q_k)
        assert jnp.allclose(mem, mem_ref, atol=1e-4, rtol=1e-4), cfg
        assert jnp.allclose(p, p_ref, atol=1e-5, rtol=1e-4), cfg

        # mem-only fast path (skips the dominant p HBM writeback).
        mem_fast, _ = memory_forward(m_k, m_v, q_k, return_p=False)
        jax.block_until_ready(mem_fast)
        assert jnp.allclose(mem_fast, mem_ref, atol=1e-4, rtol=1e-4), cfg

    print("KERNEL_OK")
</pallas_src>

<mosaic_0001>
module attributes {stable_mosaic.version = 11 : i64} {
  func.func @_memory_kernel(%arg0: i32, %arg1: i32, %arg2: memref<1x64x128xf32, #tpu.memory_space<vmem>>, %arg3: memref<1x16x64xf32, #tpu.memory_space<vmem>>, %arg4: memref<1x128x128xf32, #tpu.memory_space<vmem>>, %arg5: memref<1x16x128xf32, #tpu.memory_space<vmem>>, %arg6: memref<1x64x128xf32, #tpu.memory_space<vmem>>) attributes {dimension_semantics = [#tpu.dimension_semantics<parallel>, #tpu.dimension_semantics<parallel>], iteration_bounds = array<i64: 2, 1>, scalar_prefetch = 0 : i64, scratch_operands = 0 : i64, tpu.core_type = #tpu.core_type<tc>, window_params = [{pipeline_mode = #tpu.pipeline_mode<synchronous>, transform_indices = @transform_0, window_bounds = array<i64: 1, 64, 128>}, {pipeline_mode = #tpu.pipeline_mode<synchronous>, transform_indices = @transform_1, window_bounds = array<i64: 1, 16, 64>}, {transform_indices = @transform_2, window_bounds = array<i64: 1, 128, 128>}, {transform_indices = @transform_3, window_bounds = array<i64: 1, 16, 128>}, {transform_indices = @transform_4, window_bounds = array<i64: 1, 64, 128>}]} {
    %c0 = arith.constant 0 : index
    %c0_0 = arith.constant 0 : index
    %c0_1 = arith.constant 0 : index
    %0 = vector.load %arg2[%c0, %c0_0, %c0_1] : memref<1x64x128xf32, #tpu.memory_space<vmem>>, vector<1x64x128xf32>
    %1 = vector.shape_cast %0 : vector<1x64x128xf32> to vector<64x128xf32>
    %c0_2 = arith.constant 0 : index
    %c0_3 = arith.constant 0 : index
    %c0_4 = arith.constant 0 : index
    %2 = vector.load %arg4[%c0_2, %c0_3, %c0_4] : memref<1x128x128xf32, #tpu.memory_space<vmem>>, vector<1x128x128xf32>
    %3 = vector.shape_cast %2 : vector<1x128x128xf32> to vector<128x128xf32>
    %cst = arith.constant 0.353553385 : f32
    %4 = vector.broadcast %cst : f32 to vector<128x128xf32>
    %5 = arith.mulf %3, %4 : vector<128x128xf32>
    %cst_5 = arith.constant dense<0.000000e+00> : vector<64x128xf32>
    %6 = tpu.matmul %1, %5, %cst_5 {dimension_numbers = #tpu.dot_dimension_numbers<[1], [0], [0], [1], [0, 0, 1, 1], [], []>} : vector<64x128xf32>, vector<128x128xf32>, vector<64x128xf32> -> vector<64x128xf32>
    %cst_6 = arith.constant dense<0xFF800000> : vector<128xf32>
    %7 = vector.multi_reduction <maximumf>, %6, %cst_6 [0] : vector<64x128xf32> to vector<128xf32>
    %8 = vector.shape_cast %7 : vector<128xf32> to vector<1x128xf32>
    %9 = vector.broadcast %8 : vector<1x128xf32> to vector<64x128xf32>
    %10 = arith.subf %6, %9 : vector<64x128xf32>
    %11 = math.exp %10 : vector<64x128xf32>
    %cst_7 = arith.constant dense<0.000000e+00> : vector<128xf32>
    %12 = vector.multi_reduction <add>, %11, %cst_7 [0] : vector<64x128xf32> to vector<128xf32>
    %13 = vector.shape_cast %12 : vector<128xf32> to vector<1x128xf32>
    %14 = tpu.reciprocal %13 : vector<1x128xf32> -> vector<1x128xf32>
    %c0_8 = arith.constant 0 : index
    %c0_9 = arith.constant 0 : index
    %c0_10 = arith.constant 0 : index
    %15 = vector.load %arg3[%c0_8, %c0_9, %c0_10] : memref<1x16x64xf32, #tpu.memory_space<vmem>>, vector<1x16x64xf32>
    %16 = vector.shape_cast %15 : vector<1x16x64xf32> to vector<16x64xf32>
    %cst_11 = arith.constant dense<0.000000e+00> : vector<16x128xf32>
    %17 = tpu.matmul %16, %11, %cst_11 {dimension_numbers = #tpu.dot_dimension_numbers<[1], [0], [0], [1], [0, 0, 1, 1], [], []>} : vector<16x64xf32>, vector<64x128xf32>, vector<16x128xf32> -> vector<16x128xf32>
    %18 = vector.broadcast %14 : vector<1x128xf32> to vector<16x128xf32>
    %19 = arith.mulf %17, %18 : vector<16x128xf32>
    %c0_12 = arith.constant 0 : index
    %c0_13 = arith.constant 0 : index
    %c0_14 = arith.constant 0 : index
    %20 = vector.load %arg5[%c0_12, %c0_13, %c0_14] : memref<1x16x128xf32, #tpu.memory_space<vmem>>, vector<1x16x128xf32>
    %21 = vector.shape_cast %20 : vector<1x16x128xf32> to vector<16x128xf32>
    %22 = vector.shape_cast %19 : vector<16x128xf32> to vector<1x16x128xf32>
    tpu.vector_store %arg5[%c0_12, %c0_13, %c0_14], %22 {strides = array<i32>} : memref<1x16x128xf32, #tpu.memory_space<vmem>>, vector<1x16x128xf32>,
    %23 = vector.broadcast %14 : vector<1x128xf32> to vector<64x128xf32>
    %24 = arith.mulf %11, %23 : vector<64x128xf32>
    %c0_15 = arith.constant 0 : index
    %c0_16 = arith.constant 0 : index
    %c0_17 = arith.constant 0 : index
    %25 = vector.load %arg6[%c0_15, %c0_16, %c0_17] : memref<1x64x128xf32, #tpu.memory_space<vmem>>, vector<1x64x128xf32>
    %26 = vector.shape_cast %25 : vector<1x64x128xf32> to vector<64x128xf32>
    %27 = vector.shape_cast %24 : vector<64x128xf32> to vector<1x64x128xf32>
    tpu.vector_store %arg6[%c0_15, %c0_16, %c0_17], %27 {strides = array<i32>} : memref<1x64x128xf32, #tpu.memory_space<vmem>>, vector<1x64x128xf32>,
    return
  }
  func.func @transform_0(%arg0: i32, %arg1: i32) -> (i32, i32, i32) {
    %c0_i32 = arith.constant 0 : i32
    %c0_i32_0 = arith.constant 0 : i32
    %c0_i32_1 = arith.constant 0 : i32
    return %arg0, %c0_i32, %c0_i32_0 : i32, i32, i32
  }
  func.func @transform_1(%arg0: i32, %arg1: i32) -> (i32, i32, i32) {
    %c0_i32 = arith.constant 0 : i32
    %c0_i32_0 = arith.constant 0 : i32
    %c0_i32_1 = arith.constant 0 : i32
    return %arg0, %c0_i32, %c0_i32_0 : i32, i32, i32
  }
  func.func @transform_2(%arg0: i32, %arg1: i32) -> (i32, i32, i32) {
    %c0_i32 = arith.constant 0 : i32
    %c0_i32_0 = arith.constant 0 : i32
    return %arg0, %c0_i32, %arg1 : i32, i32, i32
  }
  func.func @transform_3(%arg0: i32, %arg1: i32) -> (i32, i32, i32) {
    %c0_i32 = arith.constant 0 : i32
    %c0_i32_0 = arith.constant 0 : i32
    return %arg0, %c0_i32, %arg1 : i32, i32, i32
  }
  func.func @transform_4(%arg0: i32, %arg1: i32) -> (i32, i32, i32) {
    %c0_i32 = arith.constant 0 : i32
    %c0_i32_0 = arith.constant 0 : i32
    return %arg0, %c0_i32, %arg1 : i32, i32, i32
  }
}

module attributes {stable_mosaic.version = 11 : i64} {
  func.func @_memory_kernel(%arg0: i32, %arg1: i32, %arg2: memref<1x64x128xf32, #tpu.memory_space<vmem>>, %arg3: memref<1x16x64xf32, #tpu.memory_space<vmem>>, %arg4: memref<1x128x128xf32, #tpu.memory_space<vmem>>, %arg5: memref<1x16x128xf32, #tpu.memory_space<vmem>>, %arg6: memref<1x64x128xf32, #tpu.memory_space<vmem>>) attributes {dimension_semantics = [#tpu.dimension_semantics<parallel>, #tpu.dimension_semantics<parallel>], iteration_bounds = array<i64: 2, 1>, scalar_prefetch = 0 : i64, scratch_operands = 0 : i64, tpu.core_type = #tpu.core_type<tc>, window_params = [{transform_indices = @transform_0, window_bounds = array<i64: 1, 64, 128>}, {transform_indices = @transform_1, window_bounds = array<i64: 1, 16, 64>}, {transform_indices = @transform_2, window_bounds = array<i64: 1, 128, 128>}, {transform_indices = @transform_3, window_bounds = array<i64: 1, 16, 128>}, {transform_indices = @transform_4, window_bounds = array<i64: 1, 64, 128>}]} {
    %c0 = arith.constant 0 : index
    %c0_0 = arith.constant 0 : index
    %c0_1 = arith.constant 0 : index
    %0 = vector.load %arg2[%c0, %c0_0, %c0_1] : memref<1x64x128xf32, #tpu.memory_space<vmem>>, vector<1x64x128xf32>
    %1 = vector.shape_cast %0 : vector<1x64x128xf32> to vector<64x128xf32>
    %c0_2 = arith.constant 0 : index
    %c0_3 = arith.constant 0 : index
    %c0_4 = arith.constant 0 : index
    %2 = vector.load %arg4[%c0_2, %c0_3, %c0_4] : memref<1x128x128xf32, #tpu.memory_space<vmem>>, vector<1x128x128xf32>
    %3 = vector.shape_cast %2 : vector<1x128x128xf32> to vector<128x128xf32>
    %cst = arith.constant 0.353553385 : f32
    %4 = vector.broadcast %cst : f32 to vector<128x128xf32>
    %5 = arith.mulf %3, %4 : vector<128x128xf32>
    %cst_5 = arith.constant dense<0.000000e+00> : vector<64x128xf32>
    %6 = tpu.matmul %1, %5, %cst_5 {dimension_numbers = #tpu.dot_dimension_numbers<[1], [0], [0], [1], [0, 0, 1, 1], [], []>} : vector<64x128xf32>, vector<128x128xf32>, vector<64x128xf32> -> vector<64x128xf32>
    %cst_6 = arith.constant dense<0xFF800000> : vector<128xf32>
    %7 = vector.multi_reduction <maximumf>, %6, %cst_6 [0] : vector<64x128xf32> to vector<128xf32>
    %8 = vector.shape_cast %7 : vector<128xf32> to vector<1x128xf32>
    %9 = vector.broadcast %8 : vector<1x128xf32> to vector<64x128xf32>
    %10 = arith.subf %6, %9 : vector<64x128xf32>
    %11 = math.exp %10 : vector<64x128xf32>
    %cst_7 = arith.constant dense<0.000000e+00> : vector<128xf32>
    %12 = vector.multi_reduction <add>, %11, %cst_7 [0] : vector<64x128xf32> to vector<128xf32>
    %13 = vector.shape_cast %12 : vector<128xf32> to vector<1x128xf32>
    %14 = tpu.reciprocal %13 : vector<1x128xf32> -> vector<1x128xf32>
    %c0_8 = arith.constant 0 : index
    %c0_9 = arith.constant 0 : index
    %c0_10 = arith.constant 0 : index
    %15 = vector.load %arg3[%c0_8, %c0_9, %c0_10] : memref<1x16x64xf32, #tpu.memory_space<vmem>>, vector<1x16x64xf32>
    %16 = vector.shape_cast %15 : vector<1x16x64xf32> to vector<16x64xf32>
    %cst_11 = arith.constant dense<0.000000e+00> : vector<16x128xf32>
    %17 = tpu.matmul %16, %11, %cst_11 {dimension_numbers = #tpu.dot_dimension_numbers<[1], [0], [0], [1], [0, 0, 1, 1], [], []>} : vector<16x64xf32>, vector<64x128xf32>, vector<16x128xf32> -> vector<16x128xf32>
    %18 = vector.broadcast %14 : vector<1x128xf32> to vector<16x128xf32>
    %19 = arith.mulf %17, %18 : vector<16x128xf32>
    %c0_12 = arith.constant 0 : index
    %c0_13 = arith.constant 0 : index
    %c0_14 = arith.constant 0 : index
    %20 = vector.load %arg5[%c0_12, %c0_13, %c0_14] : memref<1x16x128xf32, #tpu.memory_space<vmem>>, vector<1x16x128xf32>
    %21 = vector.shape_cast %20 : vector<1x16x128xf32> to vector<16x128xf32>
    %22 = vector.shape_cast %19 : vector<16x128xf32> to vector<1x16x128xf32>
    tpu.vector_store %arg5[%c0_12, %c0_13, %c0_14], %22 {strides = array<i32>} : memref<1x16x128xf32, #tpu.memory_space<vmem>>, vector<1x16x128xf32>,
    %23 = vector.broadcast %14 : vector<1x128xf32> to vector<64x128xf32>
    %24 = arith.mulf %11, %23 : vector<64x128xf32>
    %c0_15 = arith.constant 0 : index
    %c0_16 = arith.constant 0 : index
    %c0_17 = arith.constant 0 : index
    %25 = vector.load %arg6[%c0_15, %c0_16, %c0_17] : memref<1x64x128xf32, #tpu.memory_space<vmem>>, vector<1x64x128xf32>
    %26 = vector.shape_cast %25 : vector<1x64x128xf32> to vector<64x128xf32>
    %27 = vector.shape_cast %24 : vector<64x128xf32> to vector<1x64x128xf32>
    tpu.vector_store %arg6[%c0_15, %c0_16, %c0_17], %27 {strides = array<i32>} : memref<1x64x128xf32, #tpu.memory_space<vmem>>, vector<1x64x128xf32>,
    return
  }
  func.func @transform_0(%arg0: i32, %arg1: i32) -> (i32, i32, i32) {
    %c0_i32 = arith.constant 0 : i32
    %c0_i32_0 = arith.constant 0 : i32
    %c0_i32_1 = arith.constant 0 : i32
    return %arg0, %c0_i32, %c0_i32_0 : i32, i32, i32
  }
  func.func @transform_1(%arg0: i32, %arg1: i32) -> (i32, i32, i32) {
    %c0_i32 = arith.constant 0 : i32
    %c0_i32_0 = arith.constant 0 : i32
    %c0_i32_1 = arith.constant 0 : i32
    return %arg0, %c0_i32, %c0_i32_0 : i32, i32, i32
  }
  func.func @transform_2(%arg0: i32, %arg1: i32) -> (i32, i32, i32) {
    %c0_i32 = arith.constant 0 : i32
    %c0_i32_0 = arith.constant 0 : i32
    return %arg0, %c0_i32, %arg1 : i32, i32, i32
  }
  func.func @transform_3(%arg0: i32, %arg1: i32) -> (i32, i32, i32) {
    %c0_i32 = arith.constant 0 : i32
    %c0_i32_0 = arith.constant 0 : i32
    return %arg0, %c0_i32, %arg1 : i32, i32, i32
  }
  func.func @transform_4(%arg0: i32, %arg1: i32) -> (i32, i32, i32) {
    %c0_i32 = arith.constant 0 : i32
    %c0_i32_0 = arith.constant 0 : i32
    return %arg0, %c0_i32, %arg1 : i32, i32, i32
  }
}

</mosaic_0001>

<llo_original>
// kernel: tpu_custom_call.1
$region0: #{tpu_custom_call.1}
  #allocation0 [shape = 'u32[]', space=smem, size = 0x4, offset = 0x4, fixed_abs, tag = 'smem constant byte address 0x4 - core index']
  #allocation1 [shape = 'u32[144,128]{1,0:T(1,128)}', space=vmem, size = 0x12000, scoped, tag = 'internal scratch']
  %s0 = inlined_call_operand.hbm [shape: f32[2,64,128], index: 0, kind: input, shape index: {}]
  %s1 = inlined_call_operand.hbm [shape: f32[2,16,64], index: 1, kind: input, shape index: {}]
  %s2 = inlined_call_operand.hbm [shape: f32[2,128,128], index: 2, kind: input, shape index: {}]
  %s3 = inlined_call_operand.hbm [shape: f32[2,16,128], index: 3, kind: output, shape index: {0}]
  %s4 = inlined_call_operand.hbm [shape: f32[2,64,128], index: 4, kind: output, shape index: {1}]
  %5 = xla_tuple %s3, %s4
  %s6 = sld [smem:[#allocation0]]
  $region65: #{tpu_custom_call.1} parent=0
    _
  %s8 = ssub.s32 1, %s6
  %s9 = scalar_select 0, %s8, %s6
  $region1: #{tpu_custom_call.1} parent=0
    #allocation2 [shape = 'u8[32768]{0}', space=vmem, size = 0x8000, scoped, tag = 'input window, operand 0, single buffered']
    #allocation3 [shape = 's32[2]{0}', space=sflag, size = 0x8, scoped, tag = 'scoped memory for tpu_custom_call.1']
    #allocation4 [shape = 's32[2]{0}', space=sflag, size = 0x8, scoped, tag = 'scoped memory for tpu_custom_call.1']
    #allocation5 [shape = 'u8[8192]{0}', space=vmem, size = 0x2000, scoped, tag = 'input window, operand 1, single buffered']
    #allocation6 [shape = 's32[1]{0}', space=sflag, size = 0x4, scoped, tag = 'scoped memory for tpu_custom_call.1']
    #allocation7 [shape = 'u8[131072]{0}', space=vmem, size = 0x20000, scoped, tag = 'input window, operand 2']
    #allocation8 [shape = 'u8[16384]{0}', space=vmem, size = 0x4000, scoped, tag = 'output window, operand 0']
    #allocation9 [shape = 'u8[65536]{0}', space=vmem, size = 0x10000, scoped, tag = 'output window, operand 1']
    #allocation10 [shape = 's32[2]{0}', space=sflag, size = 0x8, scoped, tag = 'scoped memory for tpu_custom_call.1']
    %10 = vsyncpa [#allocation3], 0
    %11 = vsyncpa [#allocation6], 0
    %12 = vsyncpa [#allocation4], 0
    %s13 = scalar_lea.sflag [#allocation4], 1
    %14 = vsyncpa %s13, 0
    %15 = vsyncpa [#allocation10], 0
    %s16 = scalar_lea.sflag [#allocation10], 1
    %17 = vsyncpa %s16, 0
    loop: start=0, step=1, limit=4
    $region2: #{tpu_custom_call.1} parent=1 // loop_pre_header
      _
    $region3: #{tpu_custom_call.1} parent=1 // loop_header
      %s19 = sphi 0, %s23
      %p20 = scmp.ge.s32.totalorder %s19, 4
      %s26 = sphi 0, %s38
      %s27 = sphi 0, %s34
      %s28 = sphi 0, %s26
      %s29 = sphi 0, %s27
      %s30 = sphi 0, %s28
      %s31 = sphi 0, %s29
      %s41 = sphi 0, %s43
      %s44 = sphi 0, %s41
      %s45 = sphi 0, %s44
      %s61 = sphi 0, %s45
      %s67 = sphi 0, %s69
      %s70 = sphi 0, %s67
      %s71 = sphi 0, %s70
      %s87 = sphi 0, %s71
      %s95 = sphi 0, %s97
      %s98 = sphi 0, %s95
      %s99 = sphi 0, %s98
      %s115 = sphi 0, %s99
      %s123 = sphi 0, %s125
      %s126 = sphi 0, %s123
      %s127 = sphi 0, %s126
      %s143 = sphi 0, %s127
      %s151 = sphi 0, %s153
      %s154 = sphi 0, %s151
      %s155 = sphi 0, %s154
      %s171 = sphi 0, %s155
    $region4: #{tpu_custom_call.1} parent=1 // loop_header_branch
      %22 = sbr.rel (%p20) target = $region8
    $region5: #{tpu_custom_call.1} parent=1 // loop_body
      %s24 = ssub.s32 %s19, 1
      %s25 = ssub.s32 %s19, 2
      %s32 = sadd.s32 1, %s27
      %p33 = scmp.ge.s32.totalorder %s32, 1
      %s34 = scalar_select %p33, 0, %s32
      %s35 = sadd.s32 1, %s26
      %s36 = scalar_select %p33, %s35, %s26
      %p37 = scmp.ge.s32.totalorder %s36, 2
      %s38 = scalar_select %p37, 0, %s36
      %s39 = ssub.s32 %s26, %s38
      %p40 = scmp.eq.s32.totalorder %s39, 0
      %s42 = sadd.s32 %s41, 1
      %s43 = scalar_select %p40, %s41, %s42
      %p46 = pneg %p40
      %p47 = scmp.eq.s32.totalorder %s19, 1
      %p48 = por %p46, %p47
      %p49 = scmp.ne.s32.totalorder %s41, %s44
      %p50 = scmp.eq.s32.totalorder %s19, 0
      %p51 = por %p49, %p50
      %p52 = scmp.ne.s32.totalorder %s41, %s44
      %p53 = scmp.eq.s32.totalorder %s24, 1
      %p54 = por %p52, %p53
      %p55 = scmp.ne.s32.totalorder %s44, %s45
      %p56 = scmp.eq.s32.totalorder %s24, 0
      %p57 = por %p55, %p56
      %p58 = scmp.ne.s32.totalorder %s44, %s45
      %p59 = scmp.eq.s32.totalorder %s25, 1
      %p60 = por %p58, %p59
      %p62 = scmp.ne.s32.totalorder %s45, %s61
      %p63 = scmp.eq.s32.totalorder %s25, 0
      %p64 = por %p62, %p63
      %s65 = ssub.s32 %s26, %s38
      %p66 = scmp.eq.s32.totalorder %s65, 0
      %s68 = sadd.s32 %s67, 1
      %s69 = scalar_select %p66, %s67, %s68
      %p72 = pneg %p66
      %p73 = scmp.eq.s32.totalorder %s19, 1
      %p74 = por %p72, %p73
      %p75 = scmp.ne.s32.totalorder %s67, %s70
      %p76 = scmp.eq.s32.totalorder %s19, 0
      %p77 = por %p75, %p76
      %p78 = scmp.ne.s32.totalorder %s67, %s70
      %p79 = scmp.eq.s32.totalorder %s24, 1
      %p80 = por %p78, %p79
      %p81 = scmp.ne.s32.totalorder %s70, %s71
      %p82 = scmp.eq.s32.totalorder %s24, 0
      %p83 = por %p81, %p82
      %p84 = scmp.ne.s32.totalorder %s70, %s71
      %p85 = scmp.eq.s32.totalorder %s25, 1
      %p86 = por %p84, %p85
      %p88 = scmp.ne.s32.totalorder %s71, %s87
      %p89 = scmp.eq.s32.totalorder %s25, 0
      %p90 = por %p88, %p89
      %s91 = ssub.s32 %s26, %s38
      %s92 = ssub.s32 %s27, %s34
      %s93 = sor.u32 %s91, %s92
      %p94 = scmp.eq.s32.totalorder %s93, 0
      %s96 = sadd.s32 %s95, 1
      %s97 = scalar_select %p94, %s95, %s96
      %p100 = pneg %p94
      %p101 = scmp.eq.s32.totalorder %s19, 1
      %p102 = por %p100, %p101
      %p103 = scmp.ne.s32.totalorder %s95, %s98
      %p104 = scmp.eq.s32.totalorder %s19, 0
      %p105 = por %p103, %p104
      %p106 = scmp.ne.s32.totalorder %s95, %s98
      %p107 = scmp.eq.s32.totalorder %s24, 1
      %p108 = por %p106, %p107
      %p109 = scmp.ne.s32.totalorder %s98, %s99
      %p110 = scmp.eq.s32.totalorder %s24, 0
      %p111 = por %p109, %p110
      %p112 = scmp.ne.s32.totalorder %s98, %s99
      %p113 = scmp.eq.s32.totalorder %s25, 1
      %p114 = por %p112, %p113
      %p116 = scmp.ne.s32.totalorder %s99, %s115
      %p117 = scmp.eq.s32.totalorder %s25, 0
      %p118 = por %p116, %p117
      %s119 = ssub.s32 %s26, %s38
      %s120 = ssub.s32 %s27, %s34
      %s121 = sor.u32 %s119, %s120
      %p122 = scmp.eq.s32.totalorder %s121, 0
      %s124 = sadd.s32 %s123, 1
      %s125 = scalar_select %p122, %s123, %s124
      %p128 = pneg %p122
      %p129 = scmp.eq.s32.totalorder %s19, 1
      %p130 = por %p128, %p129
      %p131 = scmp.ne.s32.totalorder %s123, %s126
      %p132 = scmp.eq.s32.totalorder %s19, 0
      %p133 = por %p131, %p132
      %p134 = scmp.ne.s32.totalorder %s123, %s126
      %p135 = scmp.eq.s32.totalorder %s24, 1
      %p136 = por %p134, %p135
      %p137 = scmp.ne.s32.totalorder %s126, %s127
      %p138 = scmp.eq.s32.totalorder %s24, 0
      %p139 = por %p137, %p138
      %p140 = scmp.ne.s32.totalorder %s126, %s127
      %p141 = scmp.eq.s32.totalorder %s25, 1
      %p142 = por %p140, %p141
      %p144 = scmp.ne.s32.totalorder %s127, %s143
      %p145 = scmp.eq.s32.totalorder %s25, 0
      %p146 = por %p144, %p145
      %s147 = ssub.s32 %s26, %s38
      %s148 = ssub.s32 %s27, %s34
      %s149 = sor.u32 %s147, %s148
      %p150 = scmp.eq.s32.totalorder %s149, 0
      %s152 = sadd.s32 %s151, 1
      %s153 = scalar_select %p150, %s151, %s152
      %p156 = pneg %p150
      %p157 = scmp.eq.s32.totalorder %s19, 1
      %p158 = por %p156, %p157
      %p159 = scmp.ne.s32.totalorder %s151, %s154
      %p160 = scmp.eq.s32.totalorder %s19, 0
      %p161 = por %p159, %p160
      %p162 = scmp.ne.s32.totalorder %s151, %s154
      %p163 = scmp.eq.s32.totalorder %s24, 1
      %p164 = por %p162, %p163
      %p165 = scmp.ne.s32.totalorder %s154, %s155
      %p166 = scmp.eq.s32.totalorder %s24, 0
      %p167 = por %p165, %p166
      %p168 = scmp.ne.s32.totalorder %s154, %s155
      %p169 = scmp.eq.s32.totalorder %s25, 1
      %p170 = por %p168, %p169
      %p172 = scmp.ne.s32.totalorder %s155, %s171
      %p173 = scmp.eq.s32.totalorder %s25, 0
      %p174 = por %p172, %p173
      %p175 = scmp.le.s32.totalorder 1, %s19
      %p176 = scmp.lt.s32.totalorder %s19, 3
      %p177 = pnand %p175, %p176
      %p178 = pneg %p177
      // Predicated region
      $region9: #{tpu_custom_call.1} parent=5 // pred_check
        _
      $region10: #{tpu_custom_call.1} parent=5 // pred_check_branch
        %180 = sbr.rel (%p177) target = $region12
      $region11: #{tpu_custom_call.1} parent=5 // pred_region
        %s181 = ssub.s32 %s19, 1
        // Predicated region
        $region13: #{tpu_custom_call.1} parent=11 // pred_check
          %p182 = pneg %p57
        $region14: #{tpu_custom_call.1} parent=11 // pred_check_branch
          %184 = sbr.rel (%p182) target = $region16
        $region15: #{tpu_custom_call.1} parent=11 // pred_region
          %s186 = ssub.s32 1024, 1024
          %187 = vsyncadd [#allocation3], %s186
          %s188 = smul.addr %s28, 8
          %s189 = smul.addr %s188, 128
          %s190 = scalar_lea.hbm %s0, %s189
          %s191 = sshll.u32 [#allocation2], 4
          %s192 = int_to_ptr.vmem [resolvable:$true] %s191
          %197 = dma.hbm_to_vmem [thread:$0]  %s190, 1024, %s192, [#allocation3], 128, 128, 8
        $region16: #{tpu_custom_call.1} parent=11 // pred_fallthru
          _
        // Predicated region
        $region17: #{tpu_custom_call.1} parent=11 // pred_check
          %p198 = pneg %p83
        $region18: #{tpu_custom_call.1} parent=11 // pred_check_branch
          %200 = sbr.rel (%p198) target = $region20
        $region19: #{tpu_custom_call.1} parent=11 // pred_region
          %s202 = ssub.s32 256, 256
          %203 = vsyncadd [#allocation6], %s202
          %s204 = smul.addr %s28, 2
          %s205 = smul.addr %s204, 128
          %s206 = scalar_lea.hbm %s1, %s205
          %s207 = sshll.u32 [#allocation5], 4
          %s208 = int_to_ptr.vmem [resolvable:$true] %s207
          %213 = dma.hbm_to_vmem [thread:$0]  %s206, 256, %s208, [#allocation6], 128, 128, 8
        $region20: #{tpu_custom_call.1} parent=11 // pred_fallthru
          _
      $region12: #{tpu_custom_call.1} parent=5 // pred_fallthru
        _
      %p214 = scmp.lt.s32.totalorder %s19, 2
      // Predicated region
      $region21: #{tpu_custom_call.1} parent=5 // pred_check
        %p215 = pneg %p214
      $region22: #{tpu_custom_call.1} parent=5 // pred_check_branch
        %217 = sbr.rel (%p215) target = $region24
      $region23: #{tpu_custom_call.1} parent=5 // pred_region
        // Predicated region
        $region25: #{tpu_custom_call.1} parent=23 // pred_check
          %p218 = pneg %p105
        $region26: #{tpu_custom_call.1} parent=23 // pred_check_branch
          %220 = sbr.rel (%p218) target = $region28
        $region27: #{tpu_custom_call.1} parent=23 // pred_region
          %s221 = sand.u32 %s19, 1
          %s222 = scalar_lea.sflag [#allocation3], %s221
          %s223 = sand.u32 %s95, 1
          %s224 = smul.addr %s223, 128
          %s225 = scalar_lea.vmem [#allocation7], %s224
          %s227 = ssub.s32 2048, 2048
          %228 = vsyncadd %s222, %s227
          %s229 = smul.addr %s26, 16
          %s230 = sadd.s32 %s27, %s229
          %s231 = smul.addr %s230, 128
          %s232 = scalar_lea.hbm %s2, %s231
          %s233 = sshll.u32 %s225, 4
          %s234 = int_to_ptr.vmem [resolvable:$true] %s233
          %239 = dma.hbm_to_vmem [thread:$0]  %s232, 2048, %s234, %s222, 128, 128, 8
        $region28: #{tpu_custom_call.1} parent=23 // pred_fallthru
          _
      $region24: #{tpu_custom_call.1} parent=5 // pred_fallthru
        _
      %p240 = scmp.le.s32.totalorder 1, %s19
      %p241 = scmp.lt.s32.totalorder %s19, 3
      %p242 = pnand %p240, %p241
      %p243 = pneg %p242
      // Predicated region
      $region29: #{tpu_custom_call.1} parent=5 // pred_check
        _
      $region30: #{tpu_custom_call.1} parent=5 // pred_check_branch
        %245 = sbr.rel (%p242) target = $region32
      $region31: #{tpu_custom_call.1} parent=5 // pred_region
        %s246 = ssub.s32 %s19, 1
        // Predicated region
        $region33: #{tpu_custom_call.1} parent=31 // pred_check
          %p247 = pneg %p57
        $region34: #{tpu_custom_call.1} parent=31 // pred_check_branch
          %249 = sbr.rel (%p247) target = $region36
        $region35: #{tpu_custom_call.1} parent=31 // pred_region
          %250 = dma.done [#allocation3], 1024
        $region36: #{tpu_custom_call.1} parent=31 // pred_fallthru
          _
        // Predicated region
        $region37: #{tpu_custom_call.1} parent=31 // pred_check
          %p251 = pneg %p83
        $region38: #{tpu_custom_call.1} parent=31 // pred_check_branch
          %253 = sbr.rel (%p251) target = $region40
        $region39: #{tpu_custom_call.1} parent=31 // pred_region
          %254 = dma.done [#allocation6], 256
        $region40: #{tpu_custom_call.1} parent=31 // pred_fallthru
          _
        %s255 = sand.u32 %s24, 1
        %s256 = scalar_lea.sflag [#allocation3], %s255
        %s257 = sand.u32 %s98, 1
        %s258 = smul.addr %s257, 128
        %s259 = scalar_lea.vmem [#allocation7], %s258
        // Predicated region
        $region41: #{tpu_custom_call.1} parent=31 // pred_check
          %p260 = pneg %p111
        $region42: #{tpu_custom_call.1} parent=31 // pred_check_branch
          %262 = sbr.rel (%p260) target = $region44
        $region43: #{tpu_custom_call.1} parent=31 // pred_region
          %263 = dma.done %s256, 2048
        $region44: #{tpu_custom_call.1} parent=31 // pred_fallthru
          _
        %p264 = pneg %p57
        %p265 = pneg %p54
        %p266 = pneg %p83
        %p267 = pneg %p80
        %s268 = sand.u32 %s24, 1
        %s269 = scalar_lea.sflag [#allocation3], %s268
        %s270 = sand.u32 %s98, 1
        %s271 = smul.addr %s270, 128
        %s272 = scalar_lea.vmem [#allocation7], %s271
        %p273 = pneg %p111
        %p274 = pneg %p108
        %p275 = pneg %p139
        %p276 = pneg %p136
        %s277 = sand.u32 %s126, 1
        %s278 = scalar_lea.sflag [#allocation4], %s277
        %s279 = sand.u32 %s126, 1
        %s280 = smul.addr %s279, 16
        %s281 = scalar_lea.vmem [#allocation8], %s280
        %p282 = pneg %p167
        %p283 = pneg %p164
        %s284 = sand.u32 %s154, 1
        %s285 = scalar_lea.sflag [#allocation10], %s284
        %s286 = sand.u32 %s154, 1
        %s287 = smul.addr %s286, 64
        %s288 = scalar_lea.vmem [#allocation9], %s287
        %v289 = vld [vmem:[#allocation2] sm:$0xff]
        %v290 = vld [vmem:[#allocation2 + $0x8] sm:$0xff]
        %v291 = vld [vmem:[#allocation2 + $0x10] sm:$0xff]
        %v292 = vld [vmem:[#allocation2 + $0x18] sm:$0xff]
        %v293 = vld [vmem:[#allocation2 + $0x20] sm:$0xff]
        %v294 = vld [vmem:[#allocation2 + $0x28] sm:$0xff]
        %v295 = vld [vmem:[#allocation2 + $0x30] sm:$0xff]
        %v296 = vld [vmem:[#allocation2 + $0x38] sm:$0xff]
        %v297 = vld [vmem:[%s259] sm:$0xff]
        %v298 = vld [vmem:[%s259 + $0x8] sm:$0xff]
        %v299 = vld [vmem:[%s259 + $0x10] sm:$0xff]
        %v300 = vld [vmem:[%s259 + $0x18] sm:$0xff]
        %v301 = vld [vmem:[%s259 + $0x20] sm:$0xff]
        %v302 = vld [vmem:[%s259 + $0x28] sm:$0xff]
        %v303 = vld [vmem:[%s259 + $0x30] sm:$0xff]
        %v304 = vld [vmem:[%s259 + $0x38] sm:$0xff]
        %v305 = vld [vmem:[%s259 + $0x40] sm:$0xff]
        %v306 = vld [vmem:[%s259 + $0x48] sm:$0xff]
        %v307 = vld [vmem:[%s259 + $0x50] sm:$0xff]
        %v308 = vld [vmem:[%s259 + $0x58] sm:$0xff]
        %v309 = vld [vmem:[%s259 + $0x60] sm:$0xff]
        %v310 = vld [vmem:[%s259 + $0x68] sm:$0xff]
        %v311 = vld [vmem:[%s259 + $0x70] sm:$0xff]
        %v312 = vld [vmem:[%s259 + $0x78] sm:$0xff]
        %v313 = vmul.f32 %v297, 0.35355338
        %v314 = vmul.f32 %v298, 0.35355338
        %v315 = vmul.f32 %v299, 0.35355338
        %v316 = vmul.f32 %v300, 0.35355338
        %v317 = vmul.f32 %v301, 0.35355338
        %v318 = vmul.f32 %v302, 0.35355338
        %v319 = vmul.f32 %v303, 0.35355338
        %v320 = vmul.f32 %v304, 0.35355338
        %v321 = vmul.f32 %v305, 0.35355338
        %v322 = vmul.f32 %v306, 0.35355338
        %v323 = vmul.f32 %v307, 0.35355338
        %v324 = vmul.f32 %v308, 0.35355338
        %v325 = vmul.f32 %v309, 0.35355338
        %v326 = vmul.f32 %v310, 0.35355338
        %v327 = vmul.f32 %v311, 0.35355338
        %v328 = vmul.f32 %v312, 0.35355338
        %329 = vmatprep.subr.mxu0 0.0
        %330 = vmatpush1.msra.mxu0 %v328
        %331 = vmatprep.subr.mxu0 0.0
        %332 = vmatpush1.msra.mxu0 %v327
        %333 = vmatprep.subr.mxu0 0.0
        %334 = vmatpush1.msra.mxu0 %v326
        %335 = vmatprep.subr.mxu0 0.0
        %336 = vmatpush1.msra.mxu0 %v325
        %337 = vmatprep.subr.mxu0 0.0
        %338 = vmatpush1.msra.mxu0 %v324
        %339 = vmatprep.subr.mxu0 0.0
        %340 = vmatpush1.msra.mxu0 %v323
        %341 = vmatprep.subr.mxu0 0.0
        %342 = vmatpush1.msra.mxu0 %v322
        %343 = vmatprep.subr.mxu0 0.0
        %344 = vmatpush1.msra.mxu0 %v321
        %345 = vmatprep.subr.mxu0 0.0
        %346 = vmatpush1.msra.mxu0 %v320
        %347 = vmatprep.subr.mxu0 0.0
        %348 = vmatpush1.msra.mxu0 %v319
        %349 = vmatprep.subr.mxu0 0.0
        %350 = vmatpush1.msra.mxu0 %v318
        %351 = vmatprep.subr.mxu0 0.0
        %352 = vmatpush1.msra.mxu0 %v317
        %353 = vmatprep.subr.mxu0 0.0
        %354 = vmatpush1.msra.mxu0 %v316
        %355 = vmatprep.subr.mxu0 0.0
        %356 = vmatpush1.msra.mxu0 %v315
        %357 = vmatprep.subr.mxu0 0.0
        %358 = vmatpush1.msra.mxu0 %v314
        %359 = vmatprep.subr.mxu0 0.0
        %360 = vmatpush1.msra.mxu0 %v313
        %361 = vmatprep.subr.mxu0 0.0
        %362 = vmatpush2.msra.mxu0 0.0
        %363 = vmatprep.subr.mxu0 0.0
        %364 = vmatpush2.msra.mxu0 0.0
        %365 = vmatprep.subr.mxu0 0.0
        %366 = vmatpush2.msra.mxu0 0.0
        %367 = vmatprep.subr.mxu0 0.0
        %368 = vmatpush2.msra.mxu0 0.0
        %369 = vmatprep.subr.mxu0 0.0
        %370 = vmatpush2.msra.mxu0 0.0
        %371 = vmatprep.subr.mxu0 0.0
        %372 = vmatpush2.msra.mxu0 0.0
        %373 = vmatprep.subr.mxu0 0.0
        %374 = vmatpush2.msra.mxu0 0.0
        %375 = vmatprep.subr.mxu0 0.0
        %376 = vmatpush2.msra.mxu0 0.0
        %377 = vmatprep.subr.mxu0 0.0
        %378 = vmatpush2.msra.mxu0 0.0
        %379 = vmatprep.subr.mxu0 0.0
        %380 = vmatpush2.msra.mxu0 0.0
        %381 = vmatprep.subr.mxu0 0.0
        %382 = vmatpush2.msra.mxu0 0.0
        %383 = vmatprep.subr.mxu0 0.0
        %384 = vmatpush2.msra.mxu0 0.0
        %385 = vmatprep.subr.mxu0 0.0
        %386 = vmatpush2.msra.mxu0 0.0
        %387 = vmatprep.subr.mxu0 0.0
        %388 = vmatpush2.msra.mxu0 0.0
        %389 = vmatprep.subr.mxu0 0.0
        %390 = vmatpush2.msra.mxu0 0.0
        %391 = vmatprep.subr.mxu0 0.0
        %392 = vmatpush2.msra.mxu0 0.0
        %393 = vmatprep.mubr.f32.mxu0 0.0
        %394 = vmatmul.mubr.f32.gmra.mxu0 %v289
        %v395 = vpop.f32.mrf.mxu0
        %v396 = vadd.f32 0.0, %v395
        %v397 = vpop.f32.mrf.mxu0
        %398 = vmatprep.mubr.f32.mxu0 0.0
        %399 = vmatmul.mubr.f32.gmra.mxu0 %v290
        %v400 = vpop.f32.mrf.mxu0
        %v401 = vadd.f32 0.0, %v400
        %v402 = vpop.f32.mrf.mxu0
        %403 = vmatprep.mubr.f32.mxu0 0.0
        %404 = vmatmul.mubr.f32.gmra.mxu0 %v291
        %v405 = vpop.f32.mrf.mxu0
        %v406 = vadd.f32 0.0, %v405
        %v407 = vpop.f32.mrf.mxu0
        %408 = vmatprep.mubr.f32.mxu0 0.0
        %409 = vmatmul.mubr.f32.gmra.mxu0 %v292
        %v410 = vpop.f32.mrf.mxu0
        %v411 = vadd.f32 0.0, %v410
        %v412 = vpop.f32.mrf.mxu0
        %413 = vmatprep.mubr.f32.mxu0 0.0
        %414 = vmatmul.mubr.f32.gmra.mxu0 %v293
        %v415 = vpop.f32.mrf.mxu0
        %v416 = vadd.f32 0.0, %v415
        %v417 = vpop.f32.mrf.mxu0
        %418 = vmatprep.mubr.f32.mxu0 0.0
        %419 = vmatmul.mubr.f32.gmra.mxu0 %v294
        %v420 = vpop.f32.mrf.mxu0
        %v421 = vadd.f32 0.0, %v420
        %v422 = vpop.f32.mrf.mxu0
        %423 = vmatprep.mubr.f32.mxu0 0.0
        %424 = vmatmul.mubr.f32.gmra.mxu0 %v295
        %v425 = vpop.f32.mrf.mxu0
        %v426 = vadd.f32 0.0, %v425
        %v427 = vpop.f32.mrf.mxu0
        %428 = vmatprep.mubr.f32.mxu0 0.0
        %429 = vmatmul.mubr.f32.gmra.mxu0 %v296
        %v430 = vpop.f32.mrf.mxu0
        %v431 = vadd.f32 0.0, %v430
        %v432 = vpop.f32.mrf.mxu0
        %433 = vdwg.mxu0
        %v434 = vmax.f32 %v396, %v416
        %v435 = vmax.f32 %v401, %v421
        %v436 = vmax.f32 %v406, %v426
        %v437 = vmax.f32 %v411, %v431
        %v438 = vmax.f32 %v434, %v435
        %v439 = vmax.f32 %v436, %v437
        %v440 = vmax.f32 %v438, %v439
        %v441 = vrot.slane %v440, 4
        %v442 = vmax.f32 %v440, %v441
        %v443 = vrot.slane %v442, 2
        %v444 = vmax.f32 %v442, %v443
        %v445 = vrot.slane %v444, 1
        %v446 = vmax.f32 %v444, %v445
        %v447 = vsub.f32 %v396, %v446
        %v448 = vsub.f32 %v401, %v446
        %v449 = vsub.f32 %v406, %v446
        %v450 = vsub.f32 %v411, %v446
        %v451 = vsub.f32 %v416, %v446
        %v452 = vsub.f32 %v421, %v446
        %v453 = vsub.f32 %v426, %v446
        %v454 = vsub.f32 %v431, %v446
        %v455 = vmul.f32 %v447, 1.442695
        %v456 = vpow.pop %v455
        %v457 = vmul.f32 %v448, 1.442695
        %v458 = vpow.pop %v457
        %v459 = vmul.f32 %v449, 1.442695
        %v460 = vpow.pop %v459
        %v461 = vmul.f32 %v450, 1.442695
        %v462 = vpow.pop %v461
        %v463 = vmul.f32 %v451, 1.442695
        %v464 = vpow.pop %v463
        %v465 = vmul.f32 %v452, 1.442695
        %v466 = vpow.pop %v465
        %v467 = vmul.f32 %v453, 1.442695
        %v468 = vpow.pop %v467
        %v469 = vmul.f32 %v454, 1.442695
        %v470 = vpow.pop %v469
        %v471 = vadd.f32 %v456, %v458
        %v472 = vadd.f32 %v471, %v460
        %v473 = vadd.f32 %v472, %v462
        %v474 = vadd.f32 %v473, %v464
        %v475 = vadd.f32 %v474, %v466
        %v476 = vadd.f32 %v475, %v468
        %v477 = vadd.f32 %v476, %v470
        %v478 = vrot.slane %v477, 4
        %v479 = vadd.f32 %v477, %v478
        %v480 = vrot.slane %v479, 2
        %v481 = vadd.f32 %v479, %v480
        %v482 = vrot.slane %v481, 1
        %v483 = vadd.f32 %v481, %v482
        %v484 = vrcp.pop %v483
        %v485 = vld [vmem:[#allocation5] sm:$0xff]
        %v486 = vld [vmem:[#allocation5 + $0x8] sm:$0xff]
        %vm487 = vcmask 523264
        %v489 = vsel %vm487, %v485, 0
        %v492 = vsel %vm487, %v486, 0
        %494 = vmatprep.subr.mxu0 0.0
        %495 = vmatpush1.msra.mxu0 0.0
        %496 = vmatprep.subr.mxu0 0.0
        %497 = vmatpush1.msra.mxu0 0.0
        %498 = vmatprep.subr.mxu0 0.0
        %499 = vmatpush1.msra.mxu0 0.0
        %500 = vmatprep.subr.mxu0 0.0
        %501 = vmatpush1.msra.mxu0 0.0
        %502 = vmatprep.subr.mxu0 0.0
        %503 = vmatpush1.msra.mxu0 0.0
        %504 = vmatprep.subr.mxu0 0.0
        %505 = vmatpush1.msra.mxu0 0.0
        %506 = vmatprep.subr.mxu0 0.0
        %507 = vmatpush1.msra.mxu0 0.0
        %508 = vmatprep.subr.mxu0 0.0
        %509 = vmatpush1.msra.mxu0 0.0
        %510 = vmatprep.subr.mxu0 0.0
        %511 = vmatpush1.msra.mxu0 %v470
        %512 = vmatprep.subr.mxu0 0.0
        %513 = vmatpush1.msra.mxu0 %v468
        %514 = vmatprep.subr.mxu0 0.0
        %515 = vmatpush1.msra.mxu0 %v466
        %516 = vmatprep.subr.mxu0 0.0
        %517 = vmatpush1.msra.mxu0 %v464
        %518 = vmatprep.subr.mxu0 0.0
        %519 = vmatpush1.msra.mxu0 %v462
        %520 = vmatprep.subr.mxu0 0.0
        %521 = vmatpush1.msra.mxu0 %v460
        %522 = vmatprep.subr.mxu0 0.0
        %523 = vmatpush1.msra.mxu0 %v458
        %524 = vmatprep.subr.mxu0 0.0
        %525 = vmatpush1.msra.mxu0 %v456
        %526 = vmatprep.subr.mxu0 0.0
        %527 = vmatpush2.msra.mxu0 0.0
        %528 = vmatprep.subr.mxu0 0.0
        %529 = vmatpush2.msra.mxu0 0.0
        %530 = vmatprep.subr.mxu0 0.0
        %531 = vmatpush2.msra.mxu0 0.0
        %532 = vmatprep.subr.mxu0 0.0
        %533 = vmatpush2.msra.mxu0 0.0
        %534 = vmatprep.subr.mxu0 0.0
        %535 = vmatpush2.msra.mxu0 0.0
        %536 = vmatprep.subr.mxu0 0.0
        %537 = vmatpush2.msra.mxu0 0.0
        %538 = vmatprep.subr.mxu0 0.0
        %539 = vmatpush2.msra.mxu0 0.0
        %540 = vmatprep.subr.mxu0 0.0
        %541 = vmatpush2.msra.mxu0 0.0
        %542 = vmatprep.subr.mxu0 0.0
        %543 = vmatpush2.msra.mxu0 0.0
        %544 = vmatprep.subr.mxu0 0.0
        %545 = vmatpush2.msra.mxu0 0.0
        %546 = vmatprep.subr.mxu0 0.0
        %547 = vmatpush2.msra.mxu0 0.0
        %548 = vmatprep.subr.mxu0 0.0
        %549 = vmatpush2.msra.mxu0 0.0
        %550 = vmatprep.subr.mxu0 0.0
        %551 = vmatpush2.msra.mxu0 0.0
        %552 = vmatprep.subr.mxu0 0.0
        %553 = vmatpush2.msra.mxu0 0.0
        %554 = vmatprep.subr.mxu0 0.0
        %555 = vmatpush2.msra.mxu0 0.0
        %556 = vmatprep.subr.mxu0 0.0
        %557 = vmatpush2.msra.mxu0 0.0
        %558 = vmatprep.mubr.f32.mxu0 0.0
        %559 = vmatmul.mubr.f32.gmra.mxu0 %v489
        %v560 = vpop.f32.mrf.mxu0
        %v561 = vadd.f32 0.0, %v560
        %v562 = vpop.f32.mrf.mxu0
        %563 = vmatprep.mubr.f32.mxu0 0.0
        %564 = vmatmul.mubr.f32.gmra.mxu0 %v492
        %v565 = vpop.f32.mrf.mxu0
        %v566 = vadd.f32 0.0, %v565
        %v567 = vpop.f32.mrf.mxu0
        %568 = vdwg.mxu0
        %v569 = vmul.f32 %v561, %v484
        %v570 = vmul.f32 %v566, %v484
        %571 = vst [vmem:[%s281] sm:$0xff] %v569
        %572 = vst [vmem:[%s281 + $0x8] sm:$0xff] %v570
        %v573 = vmul.f32 %v456, %v484
        %v574 = vmul.f32 %v458, %v484
        %v575 = vmul.f32 %v460, %v484
        %v576 = vmul.f32 %v462, %v484
        %v577 = vmul.f32 %v464, %v484
        %v578 = vmul.f32 %v466, %v484
        %v579 = vmul.f32 %v468, %v484
        %v580 = vmul.f32 %v470, %v484
        %581 = vst [vmem:[%s288] sm:$0xff] %v573
        %582 = vst [vmem:[%s288 + $0x8] sm:$0xff] %v574
        %583 = vst [vmem:[%s288 + $0x10] sm:$0xff] %v575
        %584 = vst [vmem:[%s288 + $0x18] sm:$0xff] %v576
        %585 = vst [vmem:[%s288 + $0x20] sm:$0xff] %v577
        %586 = vst [vmem:[%s288 + $0x28] sm:$0xff] %v578
        %587 = vst [vmem:[%s288 + $0x30] sm:$0xff] %v579
        %588 = vst [vmem:[%s288 + $0x38] sm:$0xff] %v580
        %s589 = sand.u32 %s126, 1
        %s590 = scalar_lea.sflag [#allocation4], %s589
        %s591 = sand.u32 %s126, 1
        %s592 = smul.addr %s591, 16
        %s593 = scalar_lea.vmem [#allocation8], %s592
        %s594 = sand.u32 %s154, 1
        %s595 = scalar_lea.sflag [#allocation10], %s594
        %s596 = sand.u32 %s154, 1
        %s597 = smul.addr %s596, 64
        %s598 = scalar_lea.vmem [#allocation9], %s597
        // Predicated region
        $region45: #{tpu_custom_call.1} parent=31 // pred_check
          %p599 = pneg %p136
        $region46: #{tpu_custom_call.1} parent=31 // pred_check_branch
          %601 = sbr.rel (%p599) target = $region48
        $region47: #{tpu_custom_call.1} parent=31 // pred_region
          %s603 = ssub.s32 256, 256
          %604 = vsyncadd %s590, %s603
          %s605 = smul.addr %s28, 2
          %s606 = sadd.s32 %s29, %s605
          %s607 = smul.addr %s606, 128
          %s608 = scalar_lea.hbm %s3, %s607
          %s609 = sshll.u32 %s593, 4
          %s610 = int_to_ptr.vmem [resolvable:$true] %s609
          %615 = dma.vmem_to_hbm [thread:$0]  %s610, 256, %s608, %s590, 128, 128, 8
        $region48: #{tpu_custom_call.1} parent=31 // pred_fallthru
          _
        // Predicated region
        $region49: #{tpu_custom_call.1} parent=31 // pred_check
          %p616 = pneg %p164
        $region50: #{tpu_custom_call.1} parent=31 // pred_check_branch
          %618 = sbr.rel (%p616) target = $region52
        $region51: #{tpu_custom_call.1} parent=31 // pred_region
          %s620 = ssub.s32 1024, 1024
          %621 = vsyncadd %s595, %s620
          %s622 = smul.addr %s28, 8
          %s623 = sadd.s32 %s29, %s622
          %s624 = smul.addr %s623, 128
          %s625 = scalar_lea.hbm %s4, %s624
          %s626 = sshll.u32 %s598, 4
          %s627 = int_to_ptr.vmem [resolvable:$true] %s626
          %632 = dma.vmem_to_hbm [thread:$0]  %s627, 1024, %s625, %s595, 128, 128, 8
        $region52: #{tpu_custom_call.1} parent=31 // pred_fallthru
          _
      $region32: #{tpu_custom_call.1} parent=5 // pred_fallthru
        _
      %p633 = scmp.le.s32.totalorder 2, %s19
      // Predicated region
      $region53: #{tpu_custom_call.1} parent=5 // pred_check
        %p634 = pneg %p633
      $region54: #{tpu_custom_call.1} parent=5 // pred_check_branch
        %636 = sbr.rel (%p634) target = $region56
      $region55: #{tpu_custom_call.1} parent=5 // pred_region
        %s637 = ssub.s32 %s19, 2
        // Predicated region
        $region57: #{tpu_custom_call.1} parent=55 // pred_check
          %p638 = pneg %p142
        $region58: #{tpu_custom_call.1} parent=55 // pred_check_branch
          %640 = sbr.rel (%p638) target = $region60
        $region59: #{tpu_custom_call.1} parent=55 // pred_region
          %s641 = sand.u32 %s127, 1
          %s642 = scalar_lea.sflag [#allocation4], %s641
          %s643 = sand.u32 %s127, 1
          %s644 = smul.addr %s643, 16
          %s645 = scalar_lea.vmem [#allocation8], %s644
          %646 = dma.done %s642, 256
        $region60: #{tpu_custom_call.1} parent=55 // pred_fallthru
          _
        // Predicated region
        $region61: #{tpu_custom_call.1} parent=55 // pred_check
          %p647 = pneg %p170
        $region62: #{tpu_custom_call.1} parent=55 // pred_check_branch
          %649 = sbr.rel (%p647) target = $region64
        $region63: #{tpu_custom_call.1} parent=55 // pred_region
          %s650 = sand.u32 %s155, 1
          %s651 = scalar_lea.sflag [#allocation10], %s650
          %s652 = sand.u32 %s155, 1
          %s653 = smul.addr %s652, 64
          %s654 = scalar_lea.vmem [#allocation9], %s653
          %655 = dma.done %s651, 1024
        $region64: #{tpu_custom_call.1} parent=55 // pred_fallthru
          _
      $region56: #{tpu_custom_call.1} parent=5 // pred_fallthru
        _
    $region6: #{tpu_custom_call.1} parent=1 // loop_footer
      %s23 = sadd.s32 1, %s19
    $region7: #{tpu_custom_call.1} parent=1 // loop_footer_branch
      %18 = sbr.rel target = $region3
    $region8: #{tpu_custom_call.1} parent=1 // loop_exit
      _
    %656 = vsyncpa [#allocation3], 1
    %s657 = scalar_lea.sflag [#allocation3], 1
    %658 = vsyncpa %s657, 1
    %659 = vsyncpa [#allocation6], 1
    %660 = vsyncpa [#allocation4], 1
    %s661 = scalar_lea.sflag [#allocation4], 1
    %662 = vsyncpa %s661, 1
    %663 = vsyncpa [#allocation10], 1
    %s664 = scalar_lea.sflag [#allocation10], 1
    %665 = vsyncpa %s664, 1

// kernel: tpu_custom_call.1
$region0: #{tpu_custom_call.1}
  #allocation0 [shape = 'u32[]', space=smem, size = 0x4, offset = 0x4, fixed_abs, tag = 'smem constant byte address 0x4 - core index']
  #allocation1 [shape = 'u32[144,128]{1,0:T(1,128)}', space=vmem, size = 0x12000, scoped, tag = 'internal scratch']
  %s0 = inlined_call_operand.hbm [shape: f32[2,64,128], index: 0, kind: input, shape index: {}]
  %s1 = inlined_call_operand.hbm [shape: f32[2,16,64], index: 1, kind: input, shape index: {}]
  %s2 = inlined_call_operand.hbm [shape: f32[2,128,128], index: 2, kind: input, shape index: {}]
  %s3 = inlined_call_operand.hbm [shape: f32[2,16,128], index: 3, kind: output, shape index: {0}]
  %s4 = inlined_call_operand.hbm [shape: f32[2,64,128], index: 4, kind: output, shape index: {1}]
  %5 = xla_tuple %s3, %s4
  %s6 = sld [smem:[#allocation0]]
  $region65: #{tpu_custom_call.1} parent=0
    _
  %s8 = ssub.s32 1, %s6
  %s9 = scalar_select 0, %s8, %s6
  $region1: #{tpu_custom_call.1} parent=0
    #allocation2 [shape = 'u8[65536]{0}', space=vmem, size = 0x10000, scoped, tag = 'input window, operand 0']
    #allocation3 [shape = 's32[2]{0}', space=sflag, size = 0x8, scoped, tag = 'scoped memory for tpu_custom_call.1']
    #allocation4 [shape = 's32[2]{0}', space=sflag, size = 0x8, scoped, tag = 'scoped memory for tpu_custom_call.1']
    #allocation5 [shape = 'u8[16384]{0}', space=vmem, size = 0x4000, scoped, tag = 'input window, operand 1']
    #allocation6 [shape = 's32[2]{0}', space=sflag, size = 0x8, scoped, tag = 'scoped memory for tpu_custom_call.1']
    #allocation7 [shape = 'u8[131072]{0}', space=vmem, size = 0x20000, scoped, tag = 'input window, operand 2']
    #allocation8 [shape = 'u8[16384]{0}', space=vmem, size = 0x4000, scoped, tag = 'output window, operand 0']
    #allocation9 [shape = 'u8[65536]{0}', space=vmem, size = 0x10000, scoped, tag = 'output window, operand 1']
    #allocation10 [shape = 's32[2]{0}', space=sflag, size = 0x8, scoped, tag = 'scoped memory for tpu_custom_call.1']
    %10 = vsyncpa [#allocation3], 0
    %s11 = scalar_lea.sflag [#allocation3], 1
    %12 = vsyncpa %s11, 0
    %13 = vsyncpa [#allocation6], 0
    %s14 = scalar_lea.sflag [#allocation6], 1
    %15 = vsyncpa %s14, 0
    %16 = vsyncpa [#allocation4], 0
    %s17 = scalar_lea.sflag [#allocation4], 1
    %18 = vsyncpa %s17, 0
    %19 = vsyncpa [#allocation10], 0
    %s20 = scalar_lea.sflag [#allocation10], 1
    %21 = vsyncpa %s20, 0
    loop: start=0, step=1, limit=4
    $region2: #{tpu_custom_call.1} parent=1 // loop_pre_header
      _
    $region3: #{tpu_custom_call.1} parent=1 // loop_header
      %s23 = sphi 0, %s27
      %p24 = scmp.ge.s32.totalorder %s23, 4
      %s30 = sphi 0, %s42
      %s31 = sphi 0, %s38
      %s32 = sphi 0, %s30
      %s33 = sphi 0, %s31
      %s34 = sphi 0, %s32
      %s35 = sphi 0, %s33
      %s45 = sphi 0, %s47
      %s48 = sphi 0, %s45
      %s49 = sphi 0, %s48
      %s65 = sphi 0, %s49
      %s71 = sphi 0, %s73
      %s74 = sphi 0, %s71
      %s75 = sphi 0, %s74
      %s91 = sphi 0, %s75
      %s99 = sphi 0, %s101
      %s102 = sphi 0, %s99
      %s103 = sphi 0, %s102
      %s119 = sphi 0, %s103
      %s127 = sphi 0, %s129
      %s130 = sphi 0, %s127
      %s131 = sphi 0, %s130
      %s147 = sphi 0, %s131
      %s155 = sphi 0, %s157
      %s158 = sphi 0, %s155
      %s159 = sphi 0, %s158
      %s175 = sphi 0, %s159
    $region4: #{tpu_custom_call.1} parent=1 // loop_header_branch
      %26 = sbr.rel (%p24) target = $region8
    $region5: #{tpu_custom_call.1} parent=1 // loop_body
      %s28 = ssub.s32 %s23, 1
      %s29 = ssub.s32 %s23, 2
      %s36 = sadd.s32 1, %s31
      %p37 = scmp.ge.s32.totalorder %s36, 1
      %s38 = scalar_select %p37, 0, %s36
      %s39 = sadd.s32 1, %s30
      %s40 = scalar_select %p37, %s39, %s30
      %p41 = scmp.ge.s32.totalorder %s40, 2
      %s42 = scalar_select %p41, 0, %s40
      %s43 = ssub.s32 %s30, %s42
      %p44 = scmp.eq.s32.totalorder %s43, 0
      %s46 = sadd.s32 %s45, 1
      %s47 = scalar_select %p44, %s45, %s46
      %p50 = pneg %p44
      %p51 = scmp.eq.s32.totalorder %s23, 1
      %p52 = por %p50, %p51
      %p53 = scmp.ne.s32.totalorder %s45, %s48
      %p54 = scmp.eq.s32.totalorder %s23, 0
      %p55 = por %p53, %p54
      %p56 = scmp.ne.s32.totalorder %s45, %s48
      %p57 = scmp.eq.s32.totalorder %s28, 1
      %p58 = por %p56, %p57
      %p59 = scmp.ne.s32.totalorder %s48, %s49
      %p60 = scmp.eq.s32.totalorder %s28, 0
      %p61 = por %p59, %p60
      %p62 = scmp.ne.s32.totalorder %s48, %s49
      %p63 = scmp.eq.s32.totalorder %s29, 1
      %p64 = por %p62, %p63
      %p66 = scmp.ne.s32.totalorder %s49, %s65
      %p67 = scmp.eq.s32.totalorder %s29, 0
      %p68 = por %p66, %p67
      %s69 = ssub.s32 %s30, %s42
      %p70 = scmp.eq.s32.totalorder %s69, 0
      %s72 = sadd.s32 %s71, 1
      %s73 = scalar_select %p70, %s71, %s72
      %p76 = pneg %p70
      %p77 = scmp.eq.s32.totalorder %s23, 1
      %p78 = por %p76, %p77
      %p79 = scmp.ne.s32.totalorder %s71, %s74
      %p80 = scmp.eq.s32.totalorder %s23, 0
      %p81 = por %p79, %p80
      %p82 = scmp.ne.s32.totalorder %s71, %s74
      %p83 = scmp.eq.s32.totalorder %s28, 1
      %p84 = por %p82, %p83
      %p85 = scmp.ne.s32.totalorder %s74, %s75
      %p86 = scmp.eq.s32.totalorder %s28, 0
      %p87 = por %p85, %p86
      %p88 = scmp.ne.s32.totalorder %s74, %s75
      %p89 = scmp.eq.s32.totalorder %s29, 1
      %p90 = por %p88, %p89
      %p92 = scmp.ne.s32.totalorder %s75, %s91
      %p93 = scmp.eq.s32.totalorder %s29, 0
      %p94 = por %p92, %p93
      %s95 = ssub.s32 %s30, %s42
      %s96 = ssub.s32 %s31, %s38
      %s97 = sor.u32 %s95, %s96
      %p98 = scmp.eq.s32.totalorder %s97, 0
      %s100 = sadd.s32 %s99, 1
      %s101 = scalar_select %p98, %s99, %s100
      %p104 = pneg %p98
      %p105 = scmp.eq.s32.totalorder %s23, 1
      %p106 = por %p104, %p105
      %p107 = scmp.ne.s32.totalorder %s99, %s102
      %p108 = scmp.eq.s32.totalorder %s23, 0
      %p109 = por %p107, %p108
      %p110 = scmp.ne.s32.totalorder %s99, %s102
      %p111 = scmp.eq.s32.totalorder %s28, 1
      %p112 = por %p110, %p111
      %p113 = scmp.ne.s32.totalorder %s102, %s103
      %p114 = scmp.eq.s32.totalorder %s28, 0
      %p115 = por %p113, %p114
      %p116 = scmp.ne.s32.totalorder %s102, %s103
      %p117 = scmp.eq.s32.totalorder %s29, 1
      %p118 = por %p116, %p117
      %p120 = scmp.ne.s32.totalorder %s103, %s119
      %p121 = scmp.eq.s32.totalorder %s29, 0
      %p122 = por %p120, %p121
      %s123 = ssub.s32 %s30, %s42
      %s124 = ssub.s32 %s31, %s38
      %s125 = sor.u32 %s123, %s124
      %p126 = scmp.eq.s32.totalorder %s125, 0
      %s128 = sadd.s32 %s127, 1
      %s129 = scalar_select %p126, %s127, %s128
      %p132 = pneg %p126
      %p133 = scmp.eq.s32.totalorder %s23, 1
      %p134 = por %p132, %p133
      %p135 = scmp.ne.s32.totalorder %s127, %s130
      %p136 = scmp.eq.s32.totalorder %s23, 0
      %p137 = por %p135, %p136
      %p138 = scmp.ne.s32.totalorder %s127, %s130
      %p139 = scmp.eq.s32.totalorder %s28, 1
      %p140 = por %p138, %p139
      %p141 = scmp.ne.s32.totalorder %s130, %s131
      %p142 = scmp.eq.s32.totalorder %s28, 0
      %p143 = por %p141, %p142
      %p144 = scmp.ne.s32.totalorder %s130, %s131
      %p145 = scmp.eq.s32.totalorder %s29, 1
      %p146 = por %p144, %p145
      %p148 = scmp.ne.s32.totalorder %s131, %s147
      %p149 = scmp.eq.s32.totalorder %s29, 0
      %p150 = por %p148, %p149
      %s151 = ssub.s32 %s30, %s42
      %s152 = ssub.s32 %s31, %s38
      %s153 = sor.u32 %s151, %s152
      %p154 = scmp.eq.s32.totalorder %s153, 0
      %s156 = sadd.s32 %s155, 1
      %s157 = scalar_select %p154, %s155, %s156
      %p160 = pneg %p154
      %p161 = scmp.eq.s32.totalorder %s23, 1
      %p162 = por %p160, %p161
      %p163 = scmp.ne.s32.totalorder %s155, %s158
      %p164 = scmp.eq.s32.totalorder %s23, 0
      %p165 = por %p163, %p164
      %p166 = scmp.ne.s32.totalorder %s155, %s158
      %p167 = scmp.eq.s32.totalorder %s28, 1
      %p168 = por %p166, %p167
      %p169 = scmp.ne.s32.totalorder %s158, %s159
      %p170 = scmp.eq.s32.totalorder %s28, 0
      %p171 = por %p169, %p170
      %p172 = scmp.ne.s32.totalorder %s158, %s159
      %p173 = scmp.eq.s32.totalorder %s29, 1
      %p174 = por %p172, %p173
      %p176 = scmp.ne.s32.totalorder %s159, %s175
      %p177 = scmp.eq.s32.totalorder %s29, 0
      %p178 = por %p176, %p177
      %p179 = scmp.le.s32.totalorder 1, %s23
      %p180 = scmp.lt.s32.totalorder %s23, 3
      %p181 = pnand %p179, %p180
      %p182 = pneg %p181
      // Predicated region
      $region9: #{tpu_custom_call.1} parent=5 // pred_check
        _
      $region10: #{tpu_custom_call.1} parent=5 // pred_check_branch
        %184 = sbr.rel (%p181) target = $region12
      $region11: #{tpu_custom_call.1} parent=5 // pred_region
        %s185 = ssub.s32 %s23, 1
      $region12: #{tpu_custom_call.1} parent=5 // pred_fallthru
        _
      %p186 = scmp.lt.s32.totalorder %s23, 2
      // Predicated region
      $region13: #{tpu_custom_call.1} parent=5 // pred_check
        %p187 = pneg %p186
      $region14: #{tpu_custom_call.1} parent=5 // pred_check_branch
        %189 = sbr.rel (%p187) target = $region16
      $region15: #{tpu_custom_call.1} parent=5 // pred_region
        // Predicated region
        $region17: #{tpu_custom_call.1} parent=15 // pred_check
          %p190 = pneg %p55
        $region18: #{tpu_custom_call.1} parent=15 // pred_check_branch
          %192 = sbr.rel (%p190) target = $region20
        $region19: #{tpu_custom_call.1} parent=15 // pred_region
          %s193 = sand.u32 %s45, 1
          %s194 = scalar_lea.sflag [#allocation3], %s193
          %s195 = sand.u32 %s45, 1
          %s196 = smul.addr %s195, 64
          %s197 = scalar_lea.vmem [#allocation2], %s196
          %s199 = ssub.s32 1024, 1024
          %200 = vsyncadd %s194, %s199
          %s201 = smul.addr %s30, 8
          %s202 = smul.addr %s201, 128
          %s203 = scalar_lea.hbm %s0, %s202
          %s204 = sshll.u32 %s197, 4
          %s205 = int_to_ptr.vmem [resolvable:$true] %s204
          %210 = dma.hbm_to_vmem [thread:$0]  %s203, 1024, %s205, %s194, 128, 128, 8
        $region20: #{tpu_custom_call.1} parent=15 // pred_fallthru
          _
        // Predicated region
        $region21: #{tpu_custom_call.1} parent=15 // pred_check
          %p211 = pneg %p81
        $region22: #{tpu_custom_call.1} parent=15 // pred_check_branch
          %213 = sbr.rel (%p211) target = $region24
        $region23: #{tpu_custom_call.1} parent=15 // pred_region
          %s214 = sand.u32 %s23, 1
          %s215 = scalar_lea.sflag [#allocation6], %s214
          %s216 = sand.u32 %s71, 1
          %s217 = smul.addr %s216, 16
          %s218 = scalar_lea.vmem [#allocation5], %s217
          %s220 = ssub.s32 256, 256
          %221 = vsyncadd %s215, %s220
          %s222 = smul.addr %s30, 2
          %s223 = smul.addr %s222, 128
          %s224 = scalar_lea.hbm %s1, %s223
          %s225 = sshll.u32 %s218, 4
          %s226 = int_to_ptr.vmem [resolvable:$true] %s225
          %231 = dma.hbm_to_vmem [thread:$0]  %s224, 256, %s226, %s215, 128, 128, 8
        $region24: #{tpu_custom_call.1} parent=15 // pred_fallthru
          _
        // Predicated region
        $region25: #{tpu_custom_call.1} parent=15 // pred_check
          %p232 = pneg %p109
        $region26: #{tpu_custom_call.1} parent=15 // pred_check_branch
          %234 = sbr.rel (%p232) target = $region28
        $region27: #{tpu_custom_call.1} parent=15 // pred_region
          %s235 = sand.u32 %s23, 1
          %s236 = scalar_lea.sflag [#allocation6], %s235
          %s237 = sand.u32 %s99, 1
          %s238 = smul.addr %s237, 128
          %s239 = scalar_lea.vmem [#allocation7], %s238
          %s241 = ssub.s32 2048, 2048
          %242 = vsyncadd %s236, %s241
          %s243 = smul.addr %s30, 16
          %s244 = sadd.s32 %s31, %s243
          %s245 = smul.addr %s244, 128
          %s246 = scalar_lea.hbm %s2, %s245
          %s247 = sshll.u32 %s239, 4
          %s248 = int_to_ptr.vmem [resolvable:$true] %s247
          %253 = dma.hbm_to_vmem [thread:$0]  %s246, 2048, %s248, %s236, 128, 128, 8
        $region28: #{tpu_custom_call.1} parent=15 // pred_fallthru
          _
      $region16: #{tpu_custom_call.1} parent=5 // pred_fallthru
        _
      %p254 = scmp.le.s32.totalorder 1, %s23
      %p255 = scmp.lt.s32.totalorder %s23, 3
      %p256 = pnand %p254, %p255
      %p257 = pneg %p256
      // Predicated region
      $region29: #{tpu_custom_call.1} parent=5 // pred_check
        _
      $region30: #{tpu_custom_call.1} parent=5 // pred_check_branch
        %259 = sbr.rel (%p256) target = $region32
      $region31: #{tpu_custom_call.1} parent=5 // pred_region
        %s260 = ssub.s32 %s23, 1
        %s261 = sand.u32 %s48, 1
        %s262 = scalar_lea.sflag [#allocation3], %s261
        %s263 = sand.u32 %s48, 1
        %s264 = smul.addr %s263, 64
        %s265 = scalar_lea.vmem [#allocation2], %s264
        // Predicated region
        $region33: #{tpu_custom_call.1} parent=31 // pred_check
          %p266 = pneg %p61
        $region34: #{tpu_custom_call.1} parent=31 // pred_check_branch
          %268 = sbr.rel (%p266) target = $region36
        $region35: #{tpu_custom_call.1} parent=31 // pred_region
          %269 = dma.done %s262, 1024
        $region36: #{tpu_custom_call.1} parent=31 // pred_fallthru
          _
        %s270 = sand.u32 %s28, 1
        %s271 = scalar_lea.sflag [#allocation6], %s270
        %s272 = sand.u32 %s74, 1
        %s273 = smul.addr %s272, 16
        %s274 = scalar_lea.vmem [#allocation5], %s273
        // Predicated region
        $region37: #{tpu_custom_call.1} parent=31 // pred_check
          %p275 = pneg %p87
        $region38: #{tpu_custom_call.1} parent=31 // pred_check_branch
          %277 = sbr.rel (%p275) target = $region40
        $region39: #{tpu_custom_call.1} parent=31 // pred_region
          %278 = dma.done %s271, 256
        $region40: #{tpu_custom_call.1} parent=31 // pred_fallthru
          _
        %s279 = sand.u32 %s28, 1
        %s280 = scalar_lea.sflag [#allocation6], %s279
        %s281 = sand.u32 %s102, 1
        %s282 = smul.addr %s281, 128
        %s283 = scalar_lea.vmem [#allocation7], %s282
        // Predicated region
        $region41: #{tpu_custom_call.1} parent=31 // pred_check
          %p284 = pneg %p115
        $region42: #{tpu_custom_call.1} parent=31 // pred_check_branch
          %286 = sbr.rel (%p284) target = $region44
        $region43: #{tpu_custom_call.1} parent=31 // pred_region
          %287 = dma.done %s280, 2048
        $region44: #{tpu_custom_call.1} parent=31 // pred_fallthru
          _
        %s288 = sand.u32 %s48, 1
        %s289 = scalar_lea.sflag [#allocation3], %s288
        %s290 = sand.u32 %s48, 1
        %s291 = smul.addr %s290, 64
        %s292 = scalar_lea.vmem [#allocation2], %s291
        %p293 = pneg %p61
        %p294 = pneg %p58
        %s295 = sand.u32 %s28, 1
        %s296 = scalar_lea.sflag [#allocation6], %s295
        %s297 = sand.u32 %s74, 1
        %s298 = smul.addr %s297, 16
        %s299 = scalar_lea.vmem [#allocation5], %s298
        %p300 = pneg %p87
        %p301 = pneg %p84
        %s302 = sand.u32 %s28, 1
        %s303 = scalar_lea.sflag [#allocation6], %s302
        %s304 = sand.u32 %s102, 1
        %s305 = smul.addr %s304, 128
        %s306 = scalar_lea.vmem [#allocation7], %s305
        %p307 = pneg %p115
        %p308 = pneg %p112
        %p309 = pneg %p143
        %p310 = pneg %p140
        %s311 = sand.u32 %s130, 1
        %s312 = scalar_lea.sflag [#allocation4], %s311
        %s313 = sand.u32 %s130, 1
        %s314 = smul.addr %s313, 16
        %s315 = scalar_lea.vmem [#allocation8], %s314
        %p316 = pneg %p171
        %p317 = pneg %p168
        %s318 = sand.u32 %s158, 1
        %s319 = scalar_lea.sflag [#allocation10], %s318
        %s320 = sand.u32 %s158, 1
        %s321 = smul.addr %s320, 64
        %s322 = scalar_lea.vmem [#allocation9], %s321
        %v323 = vld [vmem:[%s265] sm:$0xff]
        %v324 = vld [vmem:[%s265 + $0x8] sm:$0xff]
        %v325 = vld [vmem:[%s265 + $0x10] sm:$0xff]
        %v326 = vld [vmem:[%s265 + $0x18] sm:$0xff]
        %v327 = vld [vmem:[%s265 + $0x20] sm:$0xff]
        %v328 = vld [vmem:[%s265 + $0x28] sm:$0xff]
        %v329 = vld [vmem:[%s265 + $0x30] sm:$0xff]
        %v330 = vld [vmem:[%s265 + $0x38] sm:$0xff]
        %v331 = vld [vmem:[%s283] sm:$0xff]
        %v332 = vld [vmem:[%s283 + $0x8] sm:$0xff]
        %v333 = vld [vmem:[%s283 + $0x10] sm:$0xff]
        %v334 = vld [vmem:[%s283 + $0x18] sm:$0xff]
        %v335 = vld [vmem:[%s283 + $0x20] sm:$0xff]
        %v336 = vld [vmem:[%s283 + $0x28] sm:$0xff]
        %v337 = vld [vmem:[%s283 + $0x30] sm:$0xff]
        %v338 = vld [vmem:[%s283 + $0x38] sm:$0xff]
        %v339 = vld [vmem:[%s283 + $0x40] sm:$0xff]
        %v340 = vld [vmem:[%s283 + $0x48] sm:$0xff]
        %v341 = vld [vmem:[%s283 + $0x50] sm:$0xff]
        %v342 = vld [vmem:[%s283 + $0x58] sm:$0xff]
        %v343 = vld [vmem:[%s283 + $0x60] sm:$0xff]
        %v344 = vld [vmem:[%s283 + $0x68] sm:$0xff]
        %v345 = vld [vmem:[%s283 + $0x70] sm:$0xff]
        %v346 = vld [vmem:[%s283 + $0x78] sm:$0xff]
        %v347 = vmul.f32 %v331, 0.35355338
        %v348 = vmul.f32 %v332, 0.35355338
        %v349 = vmul.f32 %v333, 0.35355338
        %v350 = vmul.f32 %v334, 0.35355338
        %v351 = vmul.f32 %v335, 0.35355338
        %v352 = vmul.f32 %v336, 0.35355338
        %v353 = vmul.f32 %v337, 0.35355338
        %v354 = vmul.f32 %v338, 0.35355338
        %v355 = vmul.f32 %v339, 0.35355338
        %v356 = vmul.f32 %v340, 0.35355338
        %v357 = vmul.f32 %v341, 0.35355338
        %v358 = vmul.f32 %v342, 0.35355338
        %v359 = vmul.f32 %v343, 0.35355338
        %v360 = vmul.f32 %v344, 0.35355338
        %v361 = vmul.f32 %v345, 0.35355338
        %v362 = vmul.f32 %v346, 0.35355338
        %363 = vmatprep.subr.mxu0 0.0
        %364 = vmatpush1.msra.mxu0 %v362
        %365 = vmatprep.subr.mxu0 0.0
        %366 = vmatpush1.msra.mxu0 %v361
        %367 = vmatprep.subr.mxu0 0.0
        %368 = vmatpush1.msra.mxu0 %v360
        %369 = vmatprep.subr.mxu0 0.0
        %370 = vmatpush1.msra.mxu0 %v359
        %371 = vmatprep.subr.mxu0 0.0
        %372 = vmatpush1.msra.mxu0 %v358
        %373 = vmatprep.subr.mxu0 0.0
        %374 = vmatpush1.msra.mxu0 %v357
        %375 = vmatprep.subr.mxu0 0.0
        %376 = vmatpush1.msra.mxu0 %v356
        %377 = vmatprep.subr.mxu0 0.0
        %378 = vmatpush1.msra.mxu0 %v355
        %379 = vmatprep.subr.mxu0 0.0
        %380 = vmatpush1.msra.mxu0 %v354
        %381 = vmatprep.subr.mxu0 0.0
        %382 = vmatpush1.msra.mxu0 %v353
        %383 = vmatprep.subr.mxu0 0.0
        %384 = vmatpush1.msra.mxu0 %v352
        %385 = vmatprep.subr.mxu0 0.0
        %386 = vmatpush1.msra.mxu0 %v351
        %387 = vmatprep.subr.mxu0 0.0
        %388 = vmatpush1.msra.mxu0 %v350
        %389 = vmatprep.subr.mxu0 0.0
        %390 = vmatpush1.msra.mxu0 %v349
        %391 = vmatprep.subr.mxu0 0.0
        %392 = vmatpush1.msra.mxu0 %v348
        %393 = vmatprep.subr.mxu0 0.0
        %394 = vmatpush1.msra.mxu0 %v347
        %395 = vmatprep.subr.mxu0 0.0
        %396 = vmatpush2.msra.mxu0 0.0
        %397 = vmatprep.subr.mxu0 0.0
        %398 = vmatpush2.msra.mxu0 0.0
        %399 = vmatprep.subr.mxu0 0.0
        %400 = vmatpush2.msra.mxu0 0.0
        %401 = vmatprep.subr.mxu0 0.0
        %402 = vmatpush2.msra.mxu0 0.0
        %403 = vmatprep.subr.mxu0 0.0
        %404 = vmatpush2.msra.mxu0 0.0
        %405 = vmatprep.subr.mxu0 0.0
        %406 = vmatpush2.msra.mxu0 0.0
        %407 = vmatprep.subr.mxu0 0.0
        %408 = vmatpush2.msra.mxu0 0.0
        %409 = vmatprep.subr.mxu0 0.0
        %410 = vmatpush2.msra.mxu0 0.0
        %411 = vmatprep.subr.mxu0 0.0
        %412 = vmatpush2.msra.mxu0 0.0
        %413 = vmatprep.subr.mxu0 0.0
        %414 = vmatpush2.msra.mxu0 0.0
        %415 = vmatprep.subr.mxu0 0.0
        %416 = vmatpush2.msra.mxu0 0.0
        %417 = vmatprep.subr.mxu0 0.0
        %418 = vmatpush2.msra.mxu0 0.0
        %419 = vmatprep.subr.mxu0 0.0
        %420 = vmatpush2.msra.mxu0 0.0
        %421 = vmatprep.subr.mxu0 0.0
        %422 = vmatpush2.msra.mxu0 0.0
        %423 = vmatprep.subr.mxu0 0.0
        %424 = vmatpush2.msra.mxu0 0.0
        %425 = vmatprep.subr.mxu0 0.0
        %426 = vmatpush2.msra.mxu0 0.0
        %427 = vmatprep.mubr.f32.mxu0 0.0
        %428 = vmatmul.mubr.f32.gmra.mxu0 %v323
        %v429 = vpop.f32.mrf.mxu0
        %v430 = vadd.f32 0.0, %v429
        %v431 = vpop.f32.mrf.mxu0
        %432 = vmatprep.mubr.f32.mxu0 0.0
        %433 = vmatmul.mubr.f32.gmra.mxu0 %v324
        %v434 = vpop.f32.mrf.mxu0
        %v435 = vadd.f32 0.0, %v434
        %v436 = vpop.f32.mrf.mxu0
        %437 = vmatprep.mubr.f32.mxu0 0.0
        %438 = vmatmul.mubr.f32.gmra.mxu0 %v325
        %v439 = vpop.f32.mrf.mxu0
        %v440 = vadd.f32 0.0, %v439
        %v441 = vpop.f32.mrf.mxu0
        %442 = vmatprep.mubr.f32.mxu0 0.0
        %443 = vmatmul.mubr.f32.gmra.mxu0 %v326
        %v444 = vpop.f32.mrf.mxu0
        %v445 = vadd.f32 0.0, %v444
        %v446 = vpop.f32.mrf.mxu0
        %447 = vmatprep.mubr.f32.mxu0 0.0
        %448 = vmatmul.mubr.f32.gmra.mxu0 %v327
        %v449 = vpop.f32.mrf.mxu0
        %v450 = vadd.f32 0.0, %v449
        %v451 = vpop.f32.mrf.mxu0
        %452 = vmatprep.mubr.f32.mxu0 0.0
        %453 = vmatmul.mubr.f32.gmra.mxu0 %v328
        %v454 = vpop.f32.mrf.mxu0
        %v455 = vadd.f32 0.0, %v454
        %v456 = vpop.f32.mrf.mxu0
        %457 = vmatprep.mubr.f32.mxu0 0.0
        %458 = vmatmul.mubr.f32.gmra.mxu0 %v329
        %v459 = vpop.f32.mrf.mxu0
        %v460 = vadd.f32 0.0, %v459
        %v461 = vpop.f32.mrf.mxu0
        %462 = vmatprep.mubr.f32.mxu0 0.0
        %463 = vmatmul.mubr.f32.gmra.mxu0 %v330
        %v464 = vpop.f32.mrf.mxu0
        %v465 = vadd.f32 0.0, %v464
        %v466 = vpop.f32.mrf.mxu0
        %467 = vdwg.mxu0
        %v468 = vmax.f32 %v430, %v450
        %v469 = vmax.f32 %v435, %v455
        %v470 = vmax.f32 %v440, %v460
        %v471 = vmax.f32 %v445, %v465
        %v472 = vmax.f32 %v468, %v469
        %v473 = vmax.f32 %v470, %v471
        %v474 = vmax.f32 %v472, %v473
        %v475 = vrot.slane %v474, 4
        %v476 = vmax.f32 %v474, %v475
        %v477 = vrot.slane %v476, 2
        %v478 = vmax.f32 %v476, %v477
        %v479 = vrot.slane %v478, 1
        %v480 = vmax.f32 %v478, %v479
        %v481 = vsub.f32 %v430, %v480
        %v482 = vsub.f32 %v435, %v480
        %v483 = vsub.f32 %v440, %v480
        %v484 = vsub.f32 %v445, %v480
        %v485 = vsub.f32 %v450, %v480
        %v486 = vsub.f32 %v455, %v480
        %v487 = vsub.f32 %v460, %v480
        %v488 = vsub.f32 %v465, %v480
        %v489 = vmul.f32 %v481, 1.442695
        %v490 = vpow.pop %v489
        %v491 = vmul.f32 %v482, 1.442695
        %v492 = vpow.pop %v491
        %v493 = vmul.f32 %v483, 1.442695
        %v494 = vpow.pop %v493
        %v495 = vmul.f32 %v484, 1.442695
        %v496 = vpow.pop %v495
        %v497 = vmul.f32 %v485, 1.442695
        %v498 = vpow.pop %v497
        %v499 = vmul.f32 %v486, 1.442695
        %v500 = vpow.pop %v499
        %v501 = vmul.f32 %v487, 1.442695
        %v502 = vpow.pop %v501
        %v503 = vmul.f32 %v488, 1.442695
        %v504 = vpow.pop %v503
        %v505 = vadd.f32 %v490, %v492
        %v506 = vadd.f32 %v505, %v494
        %v507 = vadd.f32 %v506, %v496
        %v508 = vadd.f32 %v507, %v498
        %v509 = vadd.f32 %v508, %v500
        %v510 = vadd.f32 %v509, %v502
        %v511 = vadd.f32 %v510, %v504
        %v512 = vrot.slane %v511, 4
        %v513 = vadd.f32 %v511, %v512
        %v514 = vrot.slane %v513, 2
        %v515 = vadd.f32 %v513, %v514
        %v516 = vrot.slane %v515, 1
        %v517 = vadd.f32 %v515, %v516
        %v518 = vrcp.pop %v517
        %v519 = vld [vmem:[%s274] sm:$0xff]
        %v520 = vld [vmem:[%s274 + $0x8] sm:$0xff]
        %vm521 = vcmask 523264
        %v523 = vsel %vm521, %v519, 0
        %v526 = vsel %vm521, %v520, 0
        %528 = vmatprep.subr.mxu0 0.0
        %529 = vmatpush1.msra.mxu0 0.0
        %530 = vmatprep.subr.mxu0 0.0
        %531 = vmatpush1.msra.mxu0 0.0
        %532 = vmatprep.subr.mxu0 0.0
        %533 = vmatpush1.msra.mxu0 0.0
        %534 = vmatprep.subr.mxu0 0.0
        %535 = vmatpush1.msra.mxu0 0.0
        %536 = vmatprep.subr.mxu0 0.0
        %537 = vmatpush1.msra.mxu0 0.0
        %538 = vmatprep.subr.mxu0 0.0
        %539 = vmatpush1.msra.mxu0 0.0
        %540 = vmatprep.subr.mxu0 0.0
        %541 = vmatpush1.msra.mxu0 0.0
        %542 = vmatprep.subr.mxu0 0.0
        %543 = vmatpush1.msra.mxu0 0.0
        %544 = vmatprep.subr.mxu0 0.0
        %545 = vmatpush1.msra.mxu0 %v504
        %546 = vmatprep.subr.mxu0 0.0
        %547 = vmatpush1.msra.mxu0 %v502
        %548 = vmatprep.subr.mxu0 0.0
        %549 = vmatpush1.msra.mxu0 %v500
        %550 = vmatprep.subr.mxu0 0.0
        %551 = vmatpush1.msra.mxu0 %v498
        %552 = vmatprep.subr.mxu0 0.0
        %553 = vmatpush1.msra.mxu0 %v496
        %554 = vmatprep.subr.mxu0 0.0
        %555 = vmatpush1.msra.mxu0 %v494
        %556 = vmatprep.subr.mxu0 0.0
        %557 = vmatpush1.msra.mxu0 %v492
        %558 = vmatprep.subr.mxu0 0.0
        %559 = vmatpush1.msra.mxu0 %v490
        %560 = vmatprep.subr.mxu0 0.0
        %561 = vmatpush2.msra.mxu0 0.0
        %562 = vmatprep.subr.mxu0 0.0
        %563 = vmatpush2.msra.mxu0 0.0
        %564 = vmatprep.subr.mxu0 0.0
        %565 = vmatpush2.msra.mxu0 0.0
        %566 = vmatprep.subr.mxu0 0.0
        %567 = vmatpush2.msra.mxu0 0.0
        %568 = vmatprep.subr.mxu0 0.0
        %569 = vmatpush2.msra.mxu0 0.0
        %570 = vmatprep.subr.mxu0 0.0
        %571 = vmatpush2.msra.mxu0 0.0
        %572 = vmatprep.subr.mxu0 0.0
        %573 = vmatpush2.msra.mxu0 0.0
        %574 = vmatprep.subr.mxu0 0.0
        %575 = vmatpush2.msra.mxu0 0.0
        %576 = vmatprep.subr.mxu0 0.0
        %577 = vmatpush2.msra.mxu0 0.0
        %578 = vmatprep.subr.mxu0 0.0
        %579 = vmatpush2.msra.mxu0 0.0
        %580 = vmatprep.subr.mxu0 0.0
        %581 = vmatpush2.msra.mxu0 0.0
        %582 = vmatprep.subr.mxu0 0.0
        %583 = vmatpush2.msra.mxu0 0.0
        %584 = vmatprep.subr.mxu0 0.0
        %585 = vmatpush2.msra.mxu0 0.0
        %586 = vmatprep.subr.mxu0 0.0
        %587 = vmatpush2.msra.mxu0 0.0
        %588 = vmatprep.subr.mxu0 0.0
        %589 = vmatpush2.msra.mxu0 0.0
        %590 = vmatprep.subr.mxu0 0.0
        %591 = vmatpush2.msra.mxu0 0.0
        %592 = vmatprep.mubr.f32.mxu0 0.0
        %593 = vmatmul.mubr.f32.gmra.mxu0 %v523
        %v594 = vpop.f32.mrf.mxu0
        %v595 = vadd.f32 0.0, %v594
        %v596 = vpop.f32.mrf.mxu0
        %597 = vmatprep.mubr.f32.mxu0 0.0
        %598 = vmatmul.mubr.f32.gmra.mxu0 %v526
        %v599 = vpop.f32.mrf.mxu0
        %v600 = vadd.f32 0.0, %v599
        %v601 = vpop.f32.mrf.mxu0
        %602 = vdwg.mxu0
        %v603 = vmul.f32 %v595, %v518
        %v604 = vmul.f32 %v600, %v518
        %605 = vst [vmem:[%s315] sm:$0xff] %v603
        %606 = vst [vmem:[%s315 + $0x8] sm:$0xff] %v604
        %v607 = vmul.f32 %v490, %v518
        %v608 = vmul.f32 %v492, %v518
        %v609 = vmul.f32 %v494, %v518
        %v610 = vmul.f32 %v496, %v518
        %v611 = vmul.f32 %v498, %v518
        %v612 = vmul.f32 %v500, %v518
        %v613 = vmul.f32 %v502, %v518
        %v614 = vmul.f32 %v504, %v518
        %615 = vst [vmem:[%s322] sm:$0xff] %v607
        %616 = vst [vmem:[%s322 + $0x8] sm:$0xff] %v608
        %617 = vst [vmem:[%s322 + $0x10] sm:$0xff] %v609
        %618 = vst [vmem:[%s322 + $0x18] sm:$0xff] %v610
        %619 = vst [vmem:[%s322 + $0x20] sm:$0xff] %v611
        %620 = vst [vmem:[%s322 + $0x28] sm:$0xff] %v612
        %621 = vst [vmem:[%s322 + $0x30] sm:$0xff] %v613
        %622 = vst [vmem:[%s322 + $0x38] sm:$0xff] %v614
        %s623 = sand.u32 %s130, 1
        %s624 = scalar_lea.sflag [#allocation4], %s623
        %s625 = sand.u32 %s130, 1
        %s626 = smul.addr %s625, 16
        %s627 = scalar_lea.vmem [#allocation8], %s626
        %s628 = sand.u32 %s158, 1
        %s629 = scalar_lea.sflag [#allocation10], %s628
        %s630 = sand.u32 %s158, 1
        %s631 = smul.addr %s630, 64
        %s632 = scalar_lea.vmem [#allocation9], %s631
        // Predicated region
        $region45: #{tpu_custom_call.1} parent=31 // pred_check
          %p633 = pneg %p140
        $region46: #{tpu_custom_call.1} parent=31 // pred_check_branch
          %635 = sbr.rel (%p633) target = $region48
        $region47: #{tpu_custom_call.1} parent=31 // pred_region
          %s637 = ssub.s32 256, 256
          %638 = vsyncadd %s624, %s637
          %s639 = smul.addr %s32, 2
          %s640 = sadd.s32 %s33, %s639
          %s641 = smul.addr %s640, 128
          %s642 = scalar_lea.hbm %s3, %s641
          %s643 = sshll.u32 %s627, 4
          %s644 = int_to_ptr.vmem [resolvable:$true] %s643
          %649 = dma.vmem_to_hbm [thread:$0]  %s644, 256, %s642, %s624, 128, 128, 8
        $region48: #{tpu_custom_call.1} parent=31 // pred_fallthru
          _
        // Predicated region
        $region49: #{tpu_custom_call.1} parent=31 // pred_check
          %p650 = pneg %p168
        $region50: #{tpu_custom_call.1} parent=31 // pred_check_branch
          %652 = sbr.rel (%p650) target = $region52
        $region51: #{tpu_custom_call.1} parent=31 // pred_region
          %s654 = ssub.s32 1024, 1024
          %655 = vsyncadd %s629, %s654
          %s656 = smul.addr %s32, 8
          %s657 = sadd.s32 %s33, %s656
          %s658 = smul.addr %s657, 128
          %s659 = scalar_lea.hbm %s4, %s658
          %s660 = sshll.u32 %s632, 4
          %s661 = int_to_ptr.vmem [resolvable:$true] %s660
          %666 = dma.vmem_to_hbm [thread:$0]  %s661, 1024, %s659, %s629, 128, 128, 8
        $region52: #{tpu_custom_call.1} parent=31 // pred_fallthru
          _
      $region32: #{tpu_custom_call.1} parent=5 // pred_fallthru
        _
      %p667 = scmp.le.s32.totalorder 2, %s23
      // Predicated region
      $region53: #{tpu_custom_call.1} parent=5 // pred_check
        %p668 = pneg %p667
      $region54: #{tpu_custom_call.1} parent=5 // pred_check_branch
        %670 = sbr.rel (%p668) target = $region56
      $region55: #{tpu_custom_call.1} parent=5 // pred_region
        %s671 = ssub.s32 %s23, 2
        // Predicated region
        $region57: #{tpu_custom_call.1} parent=55 // pred_check
          %p672 = pneg %p146
        $region58: #{tpu_custom_call.1} parent=55 // pred_check_branch
          %674 = sbr.rel (%p672) target = $region60
        $region59: #{tpu_custom_call.1} parent=55 // pred_region
          %s675 = sand.u32 %s131, 1
          %s676 = scalar_lea.sflag [#allocation4], %s675
          %s677 = sand.u32 %s131, 1
          %s678 = smul.addr %s677, 16
          %s679 = scalar_lea.vmem [#allocation8], %s678
          %680 = dma.done %s676, 256
        $region60: #{tpu_custom_call.1} parent=55 // pred_fallthru
          _
        // Predicated region
        $region61: #{tpu_custom_call.1} parent=55 // pred_check
          %p681 = pneg %p174
        $region62: #{tpu_custom_call.1} parent=55 // pred_check_branch
          %683 = sbr.rel (%p681) target = $region64
        $region63: #{tpu_custom_call.1} parent=55 // pred_region
          %s684 = sand.u32 %s159, 1
          %s685 = scalar_lea.sflag [#allocation10], %s684
          %s686 = sand.u32 %s159, 1
          %s687 = smul.addr %s686, 64
          %s688 = scalar_lea.vmem [#allocation9], %s687
          %689 = dma.done %s685, 1024
        $region64: #{tpu_custom_call.1} parent=55 // pred_fallthru
          _
      $region56: #{tpu_custom_call.1} parent=5 // pred_fallthru
        _
    $region6: #{tpu_custom_call.1} parent=1 // loop_footer
      %s27 = sadd.s32 1, %s23
    $region7: #{tpu_custom_call.1} parent=1 // loop_footer_branch
      %22 = sbr.rel target = $region3
    $region8: #{tpu_custom_call.1} parent=1 // loop_exit
      _
    %690 = vsyncpa [#allocation3], 1
    %s691 = scalar_lea.sflag [#allocation3], 1
    %692 = vsyncpa %s691, 1
    %693 = vsyncpa [#allocation6], 1
    %s694 = scalar_lea.sflag [#allocation6], 1
    %695 = vsyncpa %s694, 1
    %696 = vsyncpa [#allocation4], 1
    %s697 = scalar_lea.sflag [#allocation4], 1
    %698 = vsyncpa %s697, 1
    %699 = vsyncpa [#allocation10], 1
    %s700 = scalar_lea.sflag [#allocation10], 1
    %701 = vsyncpa %s700, 1

</llo_original>
